<compile_context>
chip_gen: v5e
topology: v5e:2x2
jax: 0.10.0
libtpu: 0.0.40
codegen_flags: <defaults>
</compile_context>

<pallas_src>
import functools

import jax
import jax.numpy as jnp
from jax.experimental import pallas as pl
from jax.experimental.pallas import tpu as pltpu

LN_EPS = 1e-5


# ---------------------------------------------------------------------------
# Pallas kernel: fused (1x1x1 conv ∘ patch conv) matmul + bias + LayerNorm
# (transposed / lane-dense-in-N layout)
# ---------------------------------------------------------------------------
def _fused_patch_ln_kernel(x_ref, w_ref, side_ref, o_ref):
    # x_ref   : (1, K, TN)  patch columns, compute dtype (bf16)
    # w_ref   : (E, K)      fused conv weight, compute dtype (bf16)
    # side_ref: (E, 8)      f32; col0 = fused bias, col1 = gamma*sw, col2 = beta*sw
    # o_ref   : (1, E, TN)  lane-dense output block, compute dtype (bf16)
    side = side_ref[...]
    bias = side[:, 0:1]
    gamma = side[:, 1:2]
    beta = side[:, 2:3]

    y = jnp.dot(w_ref[...], x_ref[0],
                preferred_element_type=jnp.float32) + bias          # (E, TN) f32
    mu = jnp.mean(y, axis=0, keepdims=True)                          # (1, TN)
    var = jnp.mean(jnp.square(y - mu), axis=0, keepdims=True)        # (1, TN)
    yn = (y - mu) * jax.lax.rsqrt(var + LN_EPS)                      # EUP rsqrt
    yn = yn * gamma + beta
    o_ref[0] = yn.astype(o_ref.dtype)                                # lane-dense store


# ---------------------------------------------------------------------------
# Wrapper helpers
# ---------------------------------------------------------------------------
def _round_up(n, m):
    return -(-n // m) * m


def _vmem_budget_and_limit():
    """Generation-aware VMEM numbers: (tiling budget, vmem_limit_bytes)."""
    cap = 64 << 20                      # conservative fallback (v7x per-TC VMEM)
    try:
        info = pltpu.get_tpu_info()
        cap = int(getattr(info, "vmem_capacity_bytes", cap)) or cap
    except Exception:
        pass
    return cap // 4, cap // 2


def _choose_col_tile(n, k, e, budget_bytes, batch):
    """Largest lane-dense column tile whose working set fits the VMEM budget."""
    def vmem(t):
        # double-buffered (k,t) bf16 input + (e,t) bf16 output,
        # single weight (e,k) bf16 + side (e,8) f32
        return 2 * (k * t * 2 + e * t * 2) + e * k * 2 + e * 8 * 4

    if n <= 256:
        tn = n                          # single full-extent block, no lane padding
    else:
        tn = min(4096, _round_up(n, 128))
        while tn > 128 and vmem(tn) > budget_bytes:
            tn = _round_up(tn // 2, 128)
    # v7x megacore: keep >= 2 parallel grid steps when batch == 1
    if batch == 1 and n >= 256 and _round_up(n, tn) // tn < 2:
        tn = _round_up(-(-n // 2), 128)
    return tn


def _fused_scale_embed(x, proj_w, proj_b, pe_w, pe_b, ln_g, ln_b, sw, p,
                       compute_dtype=jnp.bfloat16):
    B, C, D, H, W = x.shape
    E = pe_w.shape[0]
    Ho, Wo = H // p, W // p
    N = D * Ho * Wo
    K = C * p * p

    # ---- host-side weight fusion (tiny, f32) -------------------------------
    pw = proj_w.reshape(E, C).astype(jnp.float32)              # [e_mid, c]
    pe4 = pe_w.reshape(E, E, p, p).astype(jnp.float32)         # [e, e_mid, u, v]
    w_f = jnp.einsum('eiuv,ic->ecuv', pe4, pw).reshape(E, K)   # (E, K), K = (c,u,v)
    b_f = (pe_b.astype(jnp.float32)
           + jnp.einsum('eiuv,i->e', pe4, proj_b.astype(jnp.float32)))
    side = jnp.zeros((E, 8), jnp.float32)
    side = side.at[:, 0].set(b_f)
    side = side.at[:, 1].set((ln_g * sw).astype(jnp.float32))
    side = side.at[:, 2].set((ln_b * sw).astype(jnp.float32))

    # ---- host-side patchify of the cheap C-channel input, (B, K, N) layout --
    # row index = (c, u, v) to match w_f; column index = (d, i, j) = voxel id
    pr = x.reshape(B, C, D, Ho, p, Wo, p)
    pr = jnp.transpose(pr, (0, 1, 4, 6, 2, 3, 5)).reshape(B, K, N)

    budget, vmem_limit = _vmem_budget_and_limit()
    TN = _choose_col_tile(N, K, E, budget, B)
    Np = _round_up(N, TN)
    if Np != N:
        pr = jnp.pad(pr, ((0, 0), (0, 0), (0, Np - N)))

    out = pl.pallas_call(
        _fused_patch_ln_kernel,
        out_shape=jax.ShapeDtypeStruct((B, E, Np), compute_dtype),
        grid=(B, Np // TN),
        in_specs=[pl.BlockSpec((1, K, TN), lambda b, j: (b, 0, j)),
                  pl.BlockSpec((E, K), lambda b, j: (0, 0)),
                  pl.BlockSpec((E, 8), lambda b, j: (0, 0))],
        out_specs=pl.BlockSpec((1, E, TN), lambda b, j: (b, 0, j)),
        compiler_params=pltpu.CompilerParams(
            dimension_semantics=("parallel", "parallel"),
            vmem_limit_bytes=vmem_limit),
    )(pr.astype(compute_dtype), w_f.astype(compute_dtype), side)

    return out[:, :, :N] if Np != N else out


def cross_scale_patch_embedding(params, s1, s2, s3, patch_size=2,
                                compute_dtype=jnp.bfloat16):
    cfg = [(s1, '1', 0, patch_size),
           (s2, '2', 1, patch_size * 2),
           (s3, '3', 2, patch_size * 4)]
    outs = []
    for x, i, idx, p in cfg:
        outs.append(_fused_scale_embed(
            x, params[f'proj{i}_w'], params[f'proj{i}_b'],
            params[f'pe{i}_w'], params[f'pe{i}_b'],
            params[f'ln{i}_g'], params[f'ln{i}_b'],
            params['scale_weights'][idx], p, compute_dtype=compute_dtype))
    return jnp.concatenate(outs, axis=-1)


# ---------------------------------------------------------------------------
# Pure-JAX reference (unfused einsum convs, f32) for correctness check
# ---------------------------------------------------------------------------
def reference(params, s1, s2, s3, patch_size=2):
    cfg = [
        (s1, 'proj1', 'pe1', 'ln1', 0, patch_size),
        (s2, 'proj2', 'pe2', 'ln2', 1, patch_size * 2),
        (s3, 'proj3', 'pe3', 'ln3', 2, patch_size * 4),
    ]
    outs = []
    for x, pj, pe, ln, idx, p in cfg:
        E = params[f'{pj}_w'].shape[0]
        C = x.shape[1]
        proj = jnp.einsum('bcdhw,ec->bedhw', x, params[f'{pj}_w'].reshape(E, C)) \
            + params[f'{pj}_b'][None, :, None, None, None]
        B, _, D, H, W = proj.shape
        Ho, Wo = H // p, W // p
        pr = proj.reshape(B, E, D, Ho, p, Wo, p)
        y = jnp.einsum('bcdiujv,ecuv->bedij', pr, params[f'{pe}_w'].reshape(E, E, p, p)) \
            + params[f'{pe}_b'][None, :, None, None, None]
        mu = jnp.mean(y, axis=1, keepdims=True)
        var = jnp.mean(jnp.square(y - mu), axis=1, keepdims=True)
        yn = (y - mu) / jnp.sqrt(var + LN_EPS)
        yn = yn * params[f'{ln}_g'][None, :, None, None, None] \
            + params[f'{ln}_b'][None, :, None, None, None]
        yn = yn * params['scale_weights'][idx]
        outs.append(yn.reshape(B, E, -1))
    return jnp.concatenate(outs, axis=-1)


# ---------------------------------------------------------------------------
# Deterministic parameter init (shapes per the PyTorch __init__)
# ---------------------------------------------------------------------------
def init_params(key, c1, c2, c3, embed_dim, patch_size):
    ks = iter(jax.random.split(key, 24))
    E = embed_dim

    def u(k, shape, fan_in):
        bnd = 1.0 / (fan_in ** 0.5)
        return jax.random.uniform(k, shape, jnp.float32, -bnd, bnd)

    p = {}
    for i, c in enumerate((c1, c2, c3), start=1):
        p[f'proj{i}_w'] = u(next(ks), (E, c, 1, 1, 1), c)
        p[f'proj{i}_b'] = u(next(ks), (E,), c)
    for i, ps in enumerate((patch_size, patch_size * 2, patch_size * 4), start=1):
        fan = E * ps * ps
        p[f'pe{i}_w'] = u(next(ks), (E, E, 1, ps, ps), fan)
        p[f'pe{i}_b'] = u(next(ks), (E,), fan)
        p[f'ln{i}_g'] = jnp.ones((E,), jnp.float32) + 0.1 * jax.random.normal(next(ks), (E,))
        p[f'ln{i}_b'] = 0.05 * jax.random.normal(next(ks), (E,))
    p['scale_weights'] = jnp.ones((3,), jnp.float32)   # matches torch.ones(3)
    return p


if __name__ == "__main__":
    B, D, E, P = 2, 2, 32, 2
    C1, C2, C3 = 4, 8, 16
    key = jax.random.PRNGKey(0)
    kp, k1, k2, k3 = jax.random.split(key, 4)

    params = init_params(kp, C1, C2, C3, E, P)
    scale1_feat = jax.random.normal(k1, (B, C1, D, 16, 16), jnp.float32)
    scale2_feat = jax.random.normal(k2, (B, C2, D, 8, 8), jnp.float32)
    scale3_feat = jax.random.normal(k3, (B, C3, D, 8, 8), jnp.float32)

    fwd = jax.jit(functools.partial(cross_scale_patch_embedding, patch_size=P))
    out = jax.block_until_ready(fwd(params, scale1_feat, scale2_feat, scale3_feat))

    ref = jax.block_until_ready(
        reference(params, scale1_feat, scale2_feat, scale3_feat, P))

    # N = D*(16/2)^2 + D*(8/4)^2 + D*(8/8)^2 = 128 + 8 + 2 = 138 per batch
    assert out.shape == (B, E, 138), out.shape
    out_f = out.astype(jnp.float32)
    max_err = float(jnp.max(jnp.abs(out_f - ref)))
    # bf16 MXU operands + bf16 output vs a full-f32 reference -> bf16 tolerance
    assert jnp.allclose(out_f, ref, atol=5e-2, rtol=5e-2), max_err
    print("KERNEL_OK")
</pallas_src>

<mosaic_0001>
module attributes {stable_mosaic.version = 11 : i64} {
  func.func @_fused_patch_ln_kernel(%arg0: i32, %arg1: i32, %arg2: memref<1x128x8xbf16, #tpu.memory_space<vmem>>, %arg3: memref<32x128xbf16, #tpu.memory_space<vmem>>, %arg4: memref<32x8xf32, #tpu.memory_space<vmem>>, %arg5: memref<1x32x8xbf16, #tpu.memory_space<vmem>>) attributes {dimension_semantics = [#tpu.dimension_semantics<parallel>, #tpu.dimension_semantics<parallel>], iteration_bounds = array<i64: 2, 1>, scalar_prefetch = 0 : i64, scratch_operands = 0 : i64, tpu.core_type = #tpu.core_type<tc>, window_params = [{transform_indices = @transform_0, window_bounds = array<i64: 1, 128, 8>}, {pipeline_mode = #tpu.pipeline_mode<synchronous>, transform_indices = @transform_1, window_bounds = array<i64: 32, 128>}, {pipeline_mode = #tpu.pipeline_mode<synchronous>, transform_indices = @transform_2, window_bounds = array<i64: 32, 8>}, {transform_indices = @transform_3, window_bounds = array<i64: 1, 32, 8>}]} {
    %c0 = arith.constant 0 : index
    %c0_0 = arith.constant 0 : index
    %0 = vector.load %arg4[%c0, %c0_0] : memref<32x8xf32, #tpu.memory_space<vmem>>, vector<32x8xf32>
    %1 = vector.extract_strided_slice %0 {offsets = [0, 0], sizes = [32, 1], strides = [1, 1]} : vector<32x8xf32> to vector<32x1xf32>
    %2 = vector.extract_strided_slice %0 {offsets = [0, 1], sizes = [32, 1], strides = [1, 1]} : vector<32x8xf32> to vector<32x1xf32>
    %3 = vector.extract_strided_slice %0 {offsets = [0, 2], sizes = [32, 1], strides = [1, 1]} : vector<32x8xf32> to vector<32x1xf32>
    %c0_1 = arith.constant 0 : index
    %c0_2 = arith.constant 0 : index
    %4 = vector.load %arg3[%c0_1, %c0_2] : memref<32x128xbf16, #tpu.memory_space<vmem>>, vector<32x128xbf16>
    %c0_3 = arith.constant 0 : index
    %c0_4 = arith.constant 0 : index
    %c0_5 = arith.constant 0 : index
    %5 = vector.load %arg2[%c0_3, %c0_4, %c0_5] : memref<1x128x8xbf16, #tpu.memory_space<vmem>>, vector<1x128x8xbf16>
    %6 = vector.shape_cast %5 : vector<1x128x8xbf16> to vector<128x8xbf16>
    %cst = arith.constant dense<0.000000e+00> : vector<32x8xf32>
    %7 = tpu.matmul %4, %6, %cst {dimension_numbers = #tpu.dot_dimension_numbers<[1], [0], [0], [1], [0, 0, 1, 1], [], []>} : vector<32x128xbf16>, vector<128x8xbf16>, vector<32x8xf32> -> vector<32x8xf32>
    %8 = vector.broadcast %1 : vector<32x1xf32> to vector<32x8xf32>
    %9 = arith.addf %7, %8 : vector<32x8xf32>
    %cst_6 = arith.constant dense<0.000000e+00> : vector<8xf32>
    %10 = vector.multi_reduction <add>, %9, %cst_6 [0] : vector<32x8xf32> to vector<8xf32>
    %11 = vector.shape_cast %10 : vector<8xf32> to vector<1x8xf32>
    %cst_7 = arith.constant 3.200000e+01 : f32
    %12 = vector.broadcast %cst_7 : f32 to vector<1x8xf32>
    %13 = arith.divf %11, %12 : vector<1x8xf32>
    %14 = vector.broadcast %13 : vector<1x8xf32> to vector<32x8xf32>
    %15 = arith.subf %9, %14 : vector<32x8xf32>
    %16 = arith.mulf %15, %15 : vector<32x8xf32>
    %cst_8 = arith.constant dense<0.000000e+00> : vector<8xf32>
    %17 = vector.multi_reduction <add>, %16, %cst_8 [0] : vector<32x8xf32> to vector<8xf32>
    %18 = vector.shape_cast %17 : vector<8xf32> to vector<1x8xf32>
    %cst_9 = arith.constant 3.200000e+01 : f32
    %19 = vector.broadcast %cst_9 : f32 to vector<1x8xf32>
    %20 = arith.divf %18, %19 : vector<1x8xf32>
    %21 = vector.broadcast %13 : vector<1x8xf32> to vector<32x8xf32>
    %22 = arith.subf %9, %21 : vector<32x8xf32>
    %cst_10 = arith.constant 9.99999974E-6 : f32
    %23 = vector.broadcast %cst_10 : f32 to vector<1x8xf32>
    %24 = arith.addf %20, %23 : vector<1x8xf32>
    %25 = math.rsqrt %24 : vector<1x8xf32>
    %26 = vector.broadcast %25 : vector<1x8xf32> to vector<32x8xf32>
    %27 = arith.mulf %22, %26 : vector<32x8xf32>
    %28 = vector.broadcast %2 : vector<32x1xf32> to vector<32x8xf32>
    %29 = arith.mulf %27, %28 : vector<32x8xf32>
    %30 = vector.broadcast %3 : vector<32x1xf32> to vector<32x8xf32>
    %31 = arith.addf %29, %30 : vector<32x8xf32>
    %32 = arith.truncf %31 : vector<32x8xf32> to vector<32x8xbf16>
    %c0_11 = arith.constant 0 : index
    %c0_12 = arith.constant 0 : index
    %c0_13 = arith.constant 0 : index
    %33 = vector.load %arg5[%c0_11, %c0_12, %c0_13] : memref<1x32x8xbf16, #tpu.memory_space<vmem>>, vector<1x32x8xbf16>
    %34 = vector.shape_cast %33 : vector<1x32x8xbf16> to vector<32x8xbf16>
    %35 = vector.shape_cast %32 : vector<32x8xbf16> to vector<1x32x8xbf16>
    tpu.vector_store %arg5[%c0_11, %c0_12, %c0_13], %35 {strides = array<i32>} : memref<1x32x8xbf16, #tpu.memory_space<vmem>>, vector<1x32x8xbf16>,
    return
  }
  func.func @transform_0(%arg0: i32, %arg1: i32) -> (i32, i32, i32) {
    %c0_i32 = arith.constant 0 : i32
    %c0_i32_0 = arith.constant 0 : i32
    return %arg0, %c0_i32, %arg1 : i32, i32, i32
  }
  func.func @transform_1(%arg0: i32, %arg1: i32) -> (i32, i32) {
    %c0_i32 = arith.constant 0 : i32
    %c0_i32_0 = arith.constant 0 : i32
    %c0_i32_1 = arith.constant 0 : i32
    return %c0_i32, %c0_i32_0 : i32, i32
  }
  func.func @transform_2(%arg0: i32, %arg1: i32) -> (i32, i32) {
    %c0_i32 = arith.constant 0 : i32
    %c0_i32_0 = arith.constant 0 : i32
    %c0_i32_1 = arith.constant 0 : i32
    return %c0_i32, %c0_i32_0 : i32, i32
  }
  func.func @transform_3(%arg0: i32, %arg1: i32) -> (i32, i32, i32) {
    %c0_i32 = arith.constant 0 : i32
    %c0_i32_0 = arith.constant 0 : i32
    return %arg0, %c0_i32, %arg1 : i32, i32, i32
  }
}

module attributes {stable_mosaic.version = 11 : i64} {
  func.func @_fused_patch_ln_kernel(%arg0: i32, %arg1: i32, %arg2: memref<1x16x128xbf16, #tpu.memory_space<vmem>>, %arg3: memref<32x16xbf16, #tpu.memory_space<vmem>>, %arg4: memref<32x8xf32, #tpu.memory_space<vmem>>, %arg5: memref<1x32x128xbf16, #tpu.memory_space<vmem>>) attributes {dimension_semantics = [#tpu.dimension_semantics<parallel>, #tpu.dimension_semantics<parallel>], iteration_bounds = array<i64: 2, 1>, scalar_prefetch = 0 : i64, scratch_operands = 0 : i64, tpu.core_type = #tpu.core_type<tc>, window_params = [{transform_indices = @transform_0, window_bounds = array<i64: 1, 16, 128>}, {pipeline_mode = #tpu.pipeline_mode<synchronous>, transform_indices = @transform_1, window_bounds = array<i64: 32, 16>}, {pipeline_mode = #tpu.pipeline_mode<synchronous>, transform_indices = @transform_2, window_bounds = array<i64: 32, 8>}, {transform_indices = @transform_3, window_bounds = array<i64: 1, 32, 128>}]} {
    %c0 = arith.constant 0 : index
    %c0_0 = arith.constant 0 : index
    %0 = vector.load %arg4[%c0, %c0_0] : memref<32x8xf32, #tpu.memory_space<vmem>>, vector<32x8xf32>
    %1 = vector.extract_strided_slice %0 {offsets = [0, 0], sizes = [32, 1], strides = [1, 1]} : vector<32x8xf32> to vector<32x1xf32>
    %2 = vector.extract_strided_slice %0 {offsets = [0, 1], sizes = [32, 1], strides = [1, 1]} : vector<32x8xf32> to vector<32x1xf32>
    %3 = vector.extract_strided_slice %0 {offsets = [0, 2], sizes = [32, 1], strides = [1, 1]} : vector<32x8xf32> to vector<32x1xf32>
    %c0_1 = arith.constant 0 : index
    %c0_2 = arith.constant 0 : index
    %4 = vector.load %arg3[%c0_1, %c0_2] : memref<32x16xbf16, #tpu.memory_space<vmem>>, vector<32x16xbf16>
    %c0_3 = arith.constant 0 : index
    %c0_4 = arith.constant 0 : index
    %c0_5 = arith.constant 0 : index
    %5 = vector.load %arg2[%c0_3, %c0_4, %c0_5] : memref<1x16x128xbf16, #tpu.memory_space<vmem>>, vector<1x16x128xbf16>
    %6 = vector.shape_cast %5 : vector<1x16x128xbf16> to vector<16x128xbf16>
    %cst = arith.constant dense<0.000000e+00> : vector<32x128xf32>
    %7 = tpu.matmul %4, %6, %cst {dimension_numbers = #tpu.dot_dimension_numbers<[1], [0], [0], [1], [0, 0, 1, 1], [], []>} : vector<32x16xbf16>, vector<16x128xbf16>, vector<32x128xf32> -> vector<32x128xf32>
    %8 = vector.broadcast %1 : vector<32x1xf32> to vector<32x128xf32>
    %9 = arith.addf %7, %8 : vector<32x128xf32>
    %cst_6 = arith.constant dense<0.000000e+00> : vector<128xf32>
    %10 = vector.multi_reduction <add>, %9, %cst_6 [0] : vector<32x128xf32> to vector<128xf32>
    %11 = vector.shape_cast %10 : vector<128xf32> to vector<1x128xf32>
    %cst_7 = arith.constant 3.200000e+01 : f32
    %12 = vector.broadcast %cst_7 : f32 to vector<1x128xf32>
    %13 = arith.divf %11, %12 : vector<1x128xf32>
    %14 = vector.broadcast %13 : vector<1x128xf32> to vector<32x128xf32>
    %15 = arith.subf %9, %14 : vector<32x128xf32>
    %16 = arith.mulf %15, %15 : vector<32x128xf32>
    %cst_8 = arith.constant dense<0.000000e+00> : vector<128xf32>
    %17 = vector.multi_reduction <add>, %16, %cst_8 [0] : vector<32x128xf32> to vector<128xf32>
    %18 = vector.shape_cast %17 : vector<128xf32> to vector<1x128xf32>
    %cst_9 = arith.constant 3.200000e+01 : f32
    %19 = vector.broadcast %cst_9 : f32 to vector<1x128xf32>
    %20 = arith.divf %18, %19 : vector<1x128xf32>
    %21 = vector.broadcast %13 : vector<1x128xf32> to vector<32x128xf32>
    %22 = arith.subf %9, %21 : vector<32x128xf32>
    %cst_10 = arith.constant 9.99999974E-6 : f32
    %23 = vector.broadcast %cst_10 : f32 to vector<1x128xf32>
    %24 = arith.addf %20, %23 : vector<1x128xf32>
    %25 = math.rsqrt %24 : vector<1x128xf32>
    %26 = vector.broadcast %25 : vector<1x128xf32> to vector<32x128xf32>
    %27 = arith.mulf %22, %26 : vector<32x128xf32>
    %28 = vector.broadcast %2 : vector<32x1xf32> to vector<32x128xf32>
    %29 = arith.mulf %27, %28 : vector<32x128xf32>
    %30 = vector.broadcast %3 : vector<32x1xf32> to vector<32x128xf32>
    %31 = arith.addf %29, %30 : vector<32x128xf32>
    %32 = arith.truncf %31 : vector<32x128xf32> to vector<32x128xbf16>
    %c0_11 = arith.constant 0 : index
    %c0_12 = arith.constant 0 : index
    %c0_13 = arith.constant 0 : index
    %33 = vector.load %arg5[%c0_11, %c0_12, %c0_13] : memref<1x32x128xbf16, #tpu.memory_space<vmem>>, vector<1x32x128xbf16>
    %34 = vector.shape_cast %33 : vector<1x32x128xbf16> to vector<32x128xbf16>
    %35 = vector.shape_cast %32 : vector<32x128xbf16> to vector<1x32x128xbf16>
    tpu.vector_store %arg5[%c0_11, %c0_12, %c0_13], %35 {strides = array<i32>} : memref<1x32x128xbf16, #tpu.memory_space<vmem>>, vector<1x32x128xbf16>,
    return
  }
  func.func @transform_0(%arg0: i32, %arg1: i32) -> (i32, i32, i32) {
    %c0_i32 = arith.constant 0 : i32
    %c0_i32_0 = arith.constant 0 : i32
    return %arg0, %c0_i32, %arg1 : i32, i32, i32
  }
  func.func @transform_1(%arg0: i32, %arg1: i32) -> (i32, i32) {
    %c0_i32 = arith.constant 0 : i32
    %c0_i32_0 = arith.constant 0 : i32
    %c0_i32_1 = arith.constant 0 : i32
    return %c0_i32, %c0_i32_0 : i32, i32
  }
  func.func @transform_2(%arg0: i32, %arg1: i32) -> (i32, i32) {
    %c0_i32 = arith.constant 0 : i32
    %c0_i32_0 = arith.constant 0 : i32
    %c0_i32_1 = arith.constant 0 : i32
    return %c0_i32, %c0_i32_0 : i32, i32
  }
  func.func @transform_3(%arg0: i32, %arg1: i32) -> (i32, i32, i32) {
    %c0_i32 = arith.constant 0 : i32
    %c0_i32_0 = arith.constant 0 : i32
    return %arg0, %c0_i32, %arg1 : i32, i32, i32
  }
}

module attributes {stable_mosaic.version = 11 : i64} {
  func.func @_fused_patch_ln_kernel(%arg0: i32, %arg1: i32, %arg2: memref<1x1024x2xbf16, #tpu.memory_space<vmem>>, %arg3: memref<32x1024xbf16, #tpu.memory_space<vmem>>, %arg4: memref<32x8xf32, #tpu.memory_space<vmem>>, %arg5: memref<1x32x2xbf16, #tpu.memory_space<vmem>>) attributes {dimension_semantics = [#tpu.dimension_semantics<parallel>, #tpu.dimension_semantics<parallel>], iteration_bounds = array<i64: 2, 1>, scalar_prefetch = 0 : i64, scratch_operands = 0 : i64, tpu.core_type = #tpu.core_type<tc>, window_params = [{transform_indices = @transform_0, window_bounds = array<i64: 1, 1024, 2>}, {pipeline_mode = #tpu.pipeline_mode<synchronous>, transform_indices = @transform_1, window_bounds = array<i64: 32, 1024>}, {pipeline_mode = #tpu.pipeline_mode<synchronous>, transform_indices = @transform_2, window_bounds = array<i64: 32, 8>}, {transform_indices = @transform_3, window_bounds = array<i64: 1, 32, 2>}]} {
    %c0 = arith.constant 0 : index
    %c0_0 = arith.constant 0 : index
    %0 = vector.load %arg4[%c0, %c0_0] : memref<32x8xf32, #tpu.memory_space<vmem>>, vector<32x8xf32>
    %1 = vector.extract_strided_slice %0 {offsets = [0, 0], sizes = [32, 1], strides = [1, 1]} : vector<32x8xf32> to vector<32x1xf32>
    %2 = vector.extract_strided_slice %0 {offsets = [0, 1], sizes = [32, 1], strides = [1, 1]} : vector<32x8xf32> to vector<32x1xf32>
    %3 = vector.extract_strided_slice %0 {offsets = [0, 2], sizes = [32, 1], strides = [1, 1]} : vector<32x8xf32> to vector<32x1xf32>
    %c0_1 = arith.constant 0 : index
    %c0_2 = arith.constant 0 : index
    %4 = vector.load %arg3[%c0_1, %c0_2] : memref<32x1024xbf16, #tpu.memory_space<vmem>>, vector<32x1024xbf16>
    %c0_3 = arith.constant 0 : index
    %c0_4 = arith.constant 0 : index
    %c0_5 = arith.constant 0 : index
    %5 = vector.load %arg2[%c0_3, %c0_4, %c0_5] : memref<1x1024x2xbf16, #tpu.memory_space<vmem>>, vector<1x1024x2xbf16>
    %6 = vector.shape_cast %5 : vector<1x1024x2xbf16> to vector<1024x2xbf16>
    %cst = arith.constant dense<0.000000e+00> : vector<32x2xf32>
    %7 = tpu.matmul %4, %6, %cst {dimension_numbers = #tpu.dot_dimension_numbers<[1], [0], [0], [1], [0, 0, 1, 1], [], []>} : vector<32x1024xbf16>, vector<1024x2xbf16>, vector<32x2xf32> -> vector<32x2xf32>
    %8 = vector.broadcast %1 : vector<32x1xf32> to vector<32x2xf32>
    %9 = arith.addf %7, %8 : vector<32x2xf32>
    %cst_6 = arith.constant dense<0.000000e+00> : vector<2xf32>
    %10 = vector.multi_reduction <add>, %9, %cst_6 [0] : vector<32x2xf32> to vector<2xf32>
    %11 = vector.shape_cast %10 : vector<2xf32> to vector<1x2xf32>
    %cst_7 = arith.constant 3.200000e+01 : f32
    %12 = vector.broadcast %cst_7 : f32 to vector<1x2xf32>
    %13 = arith.divf %11, %12 : vector<1x2xf32>
    %14 = vector.broadcast %13 : vector<1x2xf32> to vector<32x2xf32>
    %15 = arith.subf %9, %14 : vector<32x2xf32>
    %16 = arith.mulf %15, %15 : vector<32x2xf32>
    %cst_8 = arith.constant dense<0.000000e+00> : vector<2xf32>
    %17 = vector.multi_reduction <add>, %16, %cst_8 [0] : vector<32x2xf32> to vector<2xf32>
    %18 = vector.shape_cast %17 : vector<2xf32> to vector<1x2xf32>
    %cst_9 = arith.constant 3.200000e+01 : f32
    %19 = vector.broadcast %cst_9 : f32 to vector<1x2xf32>
    %20 = arith.divf %18, %19 : vector<1x2xf32>
    %21 = vector.broadcast %13 : vector<1x2xf32> to vector<32x2xf32>
    %22 = arith.subf %9, %21 : vector<32x2xf32>
    %cst_10 = arith.constant 9.99999974E-6 : f32
    %23 = vector.broadcast %cst_10 : f32 to vector<1x2xf32>
    %24 = arith.addf %20, %23 : vector<1x2xf32>
    %25 = math.rsqrt %24 : vector<1x2xf32>
    %26 = vector.broadcast %25 : vector<1x2xf32> to vector<32x2xf32>
    %27 = arith.mulf %22, %26 : vector<32x2xf32>
    %28 = vector.broadcast %2 : vector<32x1xf32> to vector<32x2xf32>
    %29 = arith.mulf %27, %28 : vector<32x2xf32>
    %30 = vector.broadcast %3 : vector<32x1xf32> to vector<32x2xf32>
    %31 = arith.addf %29, %30 : vector<32x2xf32>
    %32 = arith.truncf %31 : vector<32x2xf32> to vector<32x2xbf16>
    %c0_11 = arith.constant 0 : index
    %c0_12 = arith.constant 0 : index
    %c0_13 = arith.constant 0 : index
    %33 = vector.load %arg5[%c0_11, %c0_12, %c0_13] : memref<1x32x2xbf16, #tpu.memory_space<vmem>>, vector<1x32x2xbf16>
    %34 = vector.shape_cast %33 : vector<1x32x2xbf16> to vector<32x2xbf16>
    %35 = vector.shape_cast %32 : vector<32x2xbf16> to vector<1x32x2xbf16>
    tpu.vector_store %arg5[%c0_11, %c0_12, %c0_13], %35 {strides = array<i32>} : memref<1x32x2xbf16, #tpu.memory_space<vmem>>, vector<1x32x2xbf16>,
    return
  }
  func.func @transform_0(%arg0: i32, %arg1: i32) -> (i32, i32, i32) {
    %c0_i32 = arith.constant 0 : i32
    %c0_i32_0 = arith.constant 0 : i32
    return %arg0, %c0_i32, %arg1 : i32, i32, i32
  }
  func.func @transform_1(%arg0: i32, %arg1: i32) -> (i32, i32) {
    %c0_i32 = arith.constant 0 : i32
    %c0_i32_0 = arith.constant 0 : i32
    %c0_i32_1 = arith.constant 0 : i32
    return %c0_i32, %c0_i32_0 : i32, i32
  }
  func.func @transform_2(%arg0: i32, %arg1: i32) -> (i32, i32) {
    %c0_i32 = arith.constant 0 : i32
    %c0_i32_0 = arith.constant 0 : i32
    %c0_i32_1 = arith.constant 0 : i32
    return %c0_i32, %c0_i32_0 : i32, i32
  }
  func.func @transform_3(%arg0: i32, %arg1: i32) -> (i32, i32, i32) {
    %c0_i32 = arith.constant 0 : i32
    %c0_i32_0 = arith.constant 0 : i32
    return %arg0, %c0_i32, %arg1 : i32, i32, i32
  }
}

</mosaic_0001>

<llo_original>
// kernel: cross_scale_patch_embedding.4
$region0: #{cross_scale_patch_embedding.4}
  #allocation0 [shape = 'u32[]', space=smem, size = 0x4, offset = 0x4, fixed_abs, tag = 'smem constant byte address 0x4 - core index']
  #allocation1 [shape = 'u32[72,128]{1,0:T(1,128)}', space=vmem, size = 0x9000, scoped, tag = 'internal scratch']
  %s0 = inlined_call_operand.vmem [shape: bf16[2,128,8], index: 0, kind: input, shape index: {}]
  %s1 = inlined_call_operand.vmem [shape: bf16[32,128], index: 1, kind: input, shape index: {}]
  %s2 = inlined_call_operand.vmem [shape: f32[32,8], index: 2, kind: input, shape index: {}]
  %s3 = inlined_call_operand.vmem [shape: bf16[2,32,8], index: 3, kind: output, shape index: {}]
  %s4 = sld [smem:[#allocation0]]
  $region45: #{cross_scale_patch_embedding.4} parent=0
    _
  %s6 = ssub.s32 1, %s4
  %s7 = scalar_select 0, %s6, %s4
  loop: start=0, step=1, limit=4
  $region2: #{cross_scale_patch_embedding.4} parent=0 // loop_pre_header
    _
  $region3: #{cross_scale_patch_embedding.4} parent=0 // loop_header
    %s9 = sphi 0, %s13
    %p10 = scmp.ge.s32.totalorder %s9, 4
    %s16 = sphi 0, %s28
    %s17 = sphi 0, %s24
    %s18 = sphi 0, %s16
    %s19 = sphi 0, %s17
    %s20 = sphi 0, %s18
    %s21 = sphi 0, %s19
    %s33 = sphi 0, %s35
    %s36 = sphi 0, %s33
    %s37 = sphi 0, %s36
    %s53 = sphi 0, %s37
    %s57 = sphi 0, %s57
    %s59 = sphi 0, %s57
    %s60 = sphi 0, %s59
    %s74 = sphi 0, %s60
    %s78 = sphi 0, %s78
    %s80 = sphi 0, %s78
    %s81 = sphi 0, %s80
    %s95 = sphi 0, %s81
    %s103 = sphi 0, %s105
    %s106 = sphi 0, %s103
    %s107 = sphi 0, %s106
    %s123 = sphi 0, %s107
  $region4: #{cross_scale_patch_embedding.4} parent=0 // loop_header_branch
    %12 = sbr.rel (%p10) target = $region8
  $region5: #{cross_scale_patch_embedding.4} parent=0 // loop_body
    %s14 = ssub.s32 %s9, 1
    %s15 = ssub.s32 %s9, 2
    %s22 = sadd.s32 1, %s17
    %p23 = scmp.ge.s32.totalorder %s22, 1
    %s24 = scalar_select %p23, 0, %s22
    %s25 = sadd.s32 1, %s16
    %s26 = scalar_select %p23, %s25, %s16
    %p27 = scmp.ge.s32.totalorder %s26, 2
    %s28 = scalar_select %p27, 0, %s26
    %s29 = ssub.s32 %s16, %s28
    %s30 = ssub.s32 %s17, %s24
    %s31 = sor.u32 %s29, %s30
    %p32 = scmp.eq.s32.totalorder %s31, 0
    %s34 = sadd.s32 %s33, 1
    %s35 = scalar_select %p32, %s33, %s34
    %p38 = pneg %p32
    %p39 = scmp.eq.s32.totalorder %s9, 1
    %p40 = por %p38, %p39
    %p41 = scmp.ne.s32.totalorder %s33, %s36
    %p42 = scmp.eq.s32.totalorder %s9, 0
    %p43 = por %p41, %p42
    %p44 = scmp.ne.s32.totalorder %s33, %s36
    %p45 = scmp.eq.s32.totalorder %s14, 1
    %p46 = por %p44, %p45
    %p47 = scmp.ne.s32.totalorder %s36, %s37
    %p48 = scmp.eq.s32.totalorder %s14, 0
    %p49 = por %p47, %p48
    %p50 = scmp.ne.s32.totalorder %s36, %s37
    %p51 = scmp.eq.s32.totalorder %s15, 1
    %p52 = por %p50, %p51
    %p54 = scmp.ne.s32.totalorder %s37, %s53
    %p55 = scmp.eq.s32.totalorder %s15, 0
    %p56 = por %p54, %p55
    %s58 = sadd.s32 %s57, 1
    %p61 = scmp.eq.s32.totalorder %s9, 1
    %p62 = scmp.ne.s32.totalorder %s57, %s59
    %p63 = scmp.eq.s32.totalorder %s9, 0
    %p64 = por %p62, %p63
    %p65 = scmp.ne.s32.totalorder %s57, %s59
    %p66 = scmp.eq.s32.totalorder %s14, 1
    %p67 = por %p65, %p66
    %p68 = scmp.ne.s32.totalorder %s59, %s60
    %p69 = scmp.eq.s32.totalorder %s14, 0
    %p70 = por %p68, %p69
    %p71 = scmp.ne.s32.totalorder %s59, %s60
    %p72 = scmp.eq.s32.totalorder %s15, 1
    %p73 = por %p71, %p72
    %p75 = scmp.ne.s32.totalorder %s60, %s74
    %p76 = scmp.eq.s32.totalorder %s15, 0
    %p77 = por %p75, %p76
    %s79 = sadd.s32 %s78, 1
    %p82 = scmp.eq.s32.totalorder %s9, 1
    %p83 = scmp.ne.s32.totalorder %s78, %s80
    %p84 = scmp.eq.s32.totalorder %s9, 0
    %p85 = por %p83, %p84
    %p86 = scmp.ne.s32.totalorder %s78, %s80
    %p87 = scmp.eq.s32.totalorder %s14, 1
    %p88 = por %p86, %p87
    %p89 = scmp.ne.s32.totalorder %s80, %s81
    %p90 = scmp.eq.s32.totalorder %s14, 0
    %p91 = por %p89, %p90
    %p92 = scmp.ne.s32.totalorder %s80, %s81
    %p93 = scmp.eq.s32.totalorder %s15, 1
    %p94 = por %p92, %p93
    %p96 = scmp.ne.s32.totalorder %s81, %s95
    %p97 = scmp.eq.s32.totalorder %s15, 0
    %p98 = por %p96, %p97
    %s99 = ssub.s32 %s16, %s28
    %s100 = ssub.s32 %s17, %s24
    %s101 = sor.u32 %s99, %s100
    %p102 = scmp.eq.s32.totalorder %s101, 0
    %s104 = sadd.s32 %s103, 1
    %s105 = scalar_select %p102, %s103, %s104
    %p108 = pneg %p102
    %p109 = scmp.eq.s32.totalorder %s9, 1
    %p110 = por %p108, %p109
    %p111 = scmp.ne.s32.totalorder %s103, %s106
    %p112 = scmp.eq.s32.totalorder %s9, 0
    %p113 = por %p111, %p112
    %p114 = scmp.ne.s32.totalorder %s103, %s106
    %p115 = scmp.eq.s32.totalorder %s14, 1
    %p116 = por %p114, %p115
    %p117 = scmp.ne.s32.totalorder %s106, %s107
    %p118 = scmp.eq.s32.totalorder %s14, 0
    %p119 = por %p117, %p118
    %p120 = scmp.ne.s32.totalorder %s106, %s107
    %p121 = scmp.eq.s32.totalorder %s15, 1
    %p122 = por %p120, %p121
    %p124 = scmp.ne.s32.totalorder %s107, %s123
    %p125 = scmp.eq.s32.totalorder %s15, 0
    %p126 = por %p124, %p125
    %p127 = scmp.le.s32.totalorder 1, %s9
    %p128 = scmp.lt.s32.totalorder %s9, 3
    %p129 = pnand %p127, %p128
    %p130 = pneg %p129
    // Predicated region
    $region9: #{cross_scale_patch_embedding.4} parent=5 // pred_check
      _
    $region10: #{cross_scale_patch_embedding.4} parent=5 // pred_check_branch
      %132 = sbr.rel (%p129) target = $region12
    $region11: #{cross_scale_patch_embedding.4} parent=5 // pred_region
      %s133 = ssub.s32 %s9, 1
      // Predicated region
      $region13: #{cross_scale_patch_embedding.4} parent=11 // pred_check
        %p134 = pneg %p70
      $region14: #{cross_scale_patch_embedding.4} parent=11 // pred_check_branch
        %136 = sbr.rel (%p134) target = $region16
      $region15: #{cross_scale_patch_embedding.4} parent=11 // pred_region
        _
      $region16: #{cross_scale_patch_embedding.4} parent=11 // pred_fallthru
        _
      // Predicated region
      $region17: #{cross_scale_patch_embedding.4} parent=11 // pred_check
        %p137 = pneg %p91
      $region18: #{cross_scale_patch_embedding.4} parent=11 // pred_check_branch
        %139 = sbr.rel (%p137) target = $region20
      $region19: #{cross_scale_patch_embedding.4} parent=11 // pred_region
        _
      $region20: #{cross_scale_patch_embedding.4} parent=11 // pred_fallthru
        _
    $region12: #{cross_scale_patch_embedding.4} parent=5 // pred_fallthru
      _
    %p140 = scmp.lt.s32.totalorder %s9, 2
    // Predicated region
    $region21: #{cross_scale_patch_embedding.4} parent=5 // pred_check
      %p141 = pneg %p140
    $region22: #{cross_scale_patch_embedding.4} parent=5 // pred_check_branch
      %143 = sbr.rel (%p141) target = $region24
    $region23: #{cross_scale_patch_embedding.4} parent=5 // pred_region
      // Predicated region
      $region25: #{cross_scale_patch_embedding.4} parent=23 // pred_check
        %p144 = pneg %p43
      $region26: #{cross_scale_patch_embedding.4} parent=23 // pred_check_branch
        %146 = sbr.rel (%p144) target = $region28
      $region27: #{cross_scale_patch_embedding.4} parent=23 // pred_region
        %p147 = scmp.lt.s32.totalorder %s16, 1
        %s148 = scalar_select %p147, %s16, 1
        %p149 = scmp.lt.s32.totalorder %s17, 0
        %s150 = scalar_select %p149, %s17, 0
        %s151 = smul.addr %s148, 16
        %s152 = sadd.s32 %s150, %s151
        %s153 = smul.addr %s152, 4
        %s154 = scalar_lea.vmem %s0, %s153
      $region28: #{cross_scale_patch_embedding.4} parent=23 // pred_fallthru
        _
    $region24: #{cross_scale_patch_embedding.4} parent=5 // pred_fallthru
      _
    %p155 = scmp.le.s32.totalorder 1, %s9
    %p156 = scmp.lt.s32.totalorder %s9, 3
    %p157 = pnand %p155, %p156
    %p158 = pneg %p157
    // Predicated region
    $region29: #{cross_scale_patch_embedding.4} parent=5 // pred_check
      _
    $region30: #{cross_scale_patch_embedding.4} parent=5 // pred_check_branch
      %160 = sbr.rel (%p157) target = $region32
    $region31: #{cross_scale_patch_embedding.4} parent=5 // pred_region
      %s161 = ssub.s32 %s9, 1
      %p162 = scmp.lt.s32.totalorder %s18, 1
      %s163 = scalar_select %p162, %s18, 1
      %p164 = scmp.lt.s32.totalorder %s19, 0
      %s165 = scalar_select %p164, %s19, 0
      %s166 = smul.addr %s163, 16
      %s167 = sadd.s32 %s165, %s166
      %s168 = smul.addr %s167, 4
      %s169 = scalar_lea.vmem %s0, %s168
      %p170 = pneg %p49
      %p171 = pneg %p46
      %p172 = pneg %p70
      %p173 = pneg %p67
      %p174 = pneg %p91
      %p175 = pneg %p88
      %p176 = pneg %p119
      %p177 = pneg %p116
      %p178 = scmp.lt.s32.totalorder %s18, 1
      %s179 = scalar_select %p178, %s18, 1
      %p180 = scmp.lt.s32.totalorder %s19, 0
      %s181 = scalar_select %p180, %s19, 0
      %s182 = smul.addr %s179, 4
      %s183 = sadd.s32 %s181, %s182
      %s184 = smul.addr %s183, 4
      %s185 = scalar_lea.vmem %s3, %s184
      %p186 = scmp.lt.s32.totalorder %s18, 1
      %s187 = scalar_select %p186, %s18, 1
      %p188 = scmp.lt.s32.totalorder %s19, 0
      %s189 = scalar_select %p188, %s19, 0
      %s190 = smul.addr %s187, 16
      %s191 = sadd.s32 %s189, %s190
      %s192 = smul.addr %s191, 4
      %s193 = scalar_lea.vmem %s0, %s192
      %p194 = scmp.lt.s32.totalorder %s18, 1
      %s195 = scalar_select %p194, %s18, 1
      %p196 = scmp.lt.s32.totalorder %s19, 0
      %s197 = scalar_select %p196, %s19, 0
      %s198 = smul.addr %s195, 4
      %s199 = sadd.s32 %s197, %s198
      %s200 = smul.addr %s199, 4
      %s201 = scalar_lea.vmem %s3, %s200
      %v202 = vld [vmem:[%s2] sm:$0xff]
      %v203 = vld [vmem:[%s2 + $0x8] sm:$0xff]
      %v204 = vld [vmem:[%s2 + $0x10] sm:$0xff]
      %v205 = vld [vmem:[%s2 + $0x18] sm:$0xff]
      %v206 = vld [vmem:[%s1] sm:$0xf]
      %v207 = vld [vmem:[%s1 + $0x4] sm:$0xf]
      %v208 = vld [vmem:[%s1 + $0x8] sm:$0xf]
      %v209 = vld [vmem:[%s1 + $0xc] sm:$0xf]
      %v210 = vld [vmem:[%s193] sm:$0xf]
      %v211 = vld [vmem:[%s193 + $0x4] sm:$0xf]
      %v212 = vld [vmem:[%s193 + $0x8] sm:$0xf]
      %v213 = vld [vmem:[%s193 + $0xc] sm:$0xf]
      %v214 = vld [vmem:[%s193 + $0x10] sm:$0xf]
      %v215 = vld [vmem:[%s193 + $0x14] sm:$0xf]
      %v216 = vld [vmem:[%s193 + $0x18] sm:$0xf]
      %v217 = vld [vmem:[%s193 + $0x1c] sm:$0xf]
      %v218 = vld [vmem:[%s193 + $0x20] sm:$0xf]
      %v219 = vld [vmem:[%s193 + $0x24] sm:$0xf]
      %v220 = vld [vmem:[%s193 + $0x28] sm:$0xf]
      %v221 = vld [vmem:[%s193 + $0x2c] sm:$0xf]
      %v222 = vld [vmem:[%s193 + $0x30] sm:$0xf]
      %v223 = vld [vmem:[%s193 + $0x34] sm:$0xf]
      %v224 = vld [vmem:[%s193 + $0x38] sm:$0xf]
      %v225 = vld [vmem:[%s193 + $0x3c] sm:$0xf]
      %227 = vset.pattern.permute.xlu0 0
      %228 = vperm.xlu0 %227, %v202
      %v229 = vpop.permute.xlu0 %228
      %232 = vset.pattern.permute.xlu0 0
      %233 = vperm.xlu0 %232, %v203
      %v234 = vpop.permute.xlu0 %233
      %237 = vset.pattern.permute.xlu0 0
      %238 = vperm.xlu0 %237, %v204
      %v239 = vpop.permute.xlu0 %238
      %242 = vset.pattern.permute.xlu0 0
      %243 = vperm.xlu0 %242, %v205
      %v244 = vpop.permute.xlu0 %243
      %v250 = vunpack.c.l.b16 %v206
      %v251 = vunpack.c.l.b16 %v207
      %v252 = vunpack.c.l.b16 %v208
      %v253 = vunpack.c.l.b16 %v209
      %v254 = vpack.c.b16 %v251, %v250
      %v255 = vpack.c.b16 %v253, %v252
      %v274 = vunpack.c.l.b16 %v210
      %v275 = vunpack.c.l.b16 %v211
      %v276 = vunpack.c.l.b16 %v212
      %v277 = vunpack.c.l.b16 %v213
      %v278 = vunpack.c.l.b16 %v214
      %v279 = vunpack.c.l.b16 %v215
      %v280 = vunpack.c.l.b16 %v216
      %v281 = vunpack.c.l.b16 %v217
      %v282 = vunpack.c.l.b16 %v218
      %v283 = vunpack.c.l.b16 %v219
      %v284 = vunpack.c.l.b16 %v220
      %v285 = vunpack.c.l.b16 %v221
      %v286 = vunpack.c.l.b16 %v222
      %v287 = vunpack.c.l.b16 %v223
      %v288 = vunpack.c.l.b16 %v224
      %v289 = vunpack.c.l.b16 %v225
      %v290 = vpack.c.b16 %v275, %v274
      %v291 = vpack.c.b16 %v277, %v276
      %v292 = vpack.c.b16 %v279, %v278
      %v293 = vpack.c.b16 %v281, %v280
      %v294 = vpack.c.b16 %v283, %v282
      %v295 = vpack.c.b16 %v285, %v284
      %v296 = vpack.c.b16 %v287, %v286
      %v297 = vpack.c.b16 %v289, %v288
      %306 = vmatpush.bf16.msra.mxu0 %v297
      %307 = vmatpush.bf16.msra.mxu0 %v296
      %308 = vmatpush.bf16.msra.mxu0 %v295
      %309 = vmatpush.bf16.msra.mxu0 %v294
      %310 = vmatpush.bf16.msra.mxu0 %v293
      %311 = vmatpush.bf16.msra.mxu0 %v292
      %312 = vmatpush.bf16.msra.mxu0 %v291
      %313 = vmatpush.bf16.msra.mxu0 %v290
      %314 = vmatmul.bf16.gmra.mxu0 %v254
      %v315 = vpop.f32.mrf.mxu0
      %v316 = vadd.f32 %v229, %v315
      %v317 = vpop.f32.mrf.mxu0
      %v318 = vadd.f32 %v234, %v317
      %319 = vmatmul.bf16.gmra.mxu0 %v255
      %v320 = vpop.f32.mrf.mxu0
      %v321 = vadd.f32 %v239, %v320
      %v322 = vpop.f32.mrf.mxu0
      %v323 = vadd.f32 %v244, %v322
      %324 = vdwg.mxu0
      %vm325 = vcmask 64512
      %v326 = vsel %vm325, %v316, 0.0
      %v327 = vsel %vm325, %v318, 0.0
      %v328 = vadd.f32 %v326, %v327
      %v329 = vsel %vm325, %v321, 0.0
      %v330 = vadd.f32 %v328, %v329
      %v331 = vsel %vm325, %v323, 0.0
      %v332 = vadd.f32 %v330, %v331
      %v333 = vrot.slane %v332, 4
      %v334 = vadd.f32 %v332, %v333
      %v335 = vrot.slane %v334, 2
      %v336 = vadd.f32 %v334, %v335
      %v337 = vrot.slane %v336, 1
      %v338 = vadd.f32 %v336, %v337
      %v339 = vrcp.pop 32.0
      %v340 = vmul.f32 32.0, %v339
      %v341 = vsub.f32 1.0, %v340
      %v342 = vmul.f32 %v339, %v341
      %v343 = vadd.f32 %v339, %v342
      %vm344 = vweird.f32 %v339
      %v345 = vsel %vm344, %v339, %v343
      %v346 = vmul.f32 %v338, %v345
      %v347 = vsub.f32 %v316, %v346
      %v348 = vsub.f32 %v318, %v346
      %v349 = vsub.f32 %v321, %v346
      %v350 = vsub.f32 %v323, %v346
      %v351 = vmul.f32 %v347, %v347
      %v352 = vmul.f32 %v348, %v348
      %v353 = vmul.f32 %v349, %v349
      %v354 = vmul.f32 %v350, %v350
      %v355 = vsel %vm325, %v351, 0.0
      %v356 = vsel %vm325, %v352, 0.0
      %v357 = vadd.f32 %v355, %v356
      %v358 = vsel %vm325, %v353, 0.0
      %v359 = vadd.f32 %v357, %v358
      %v360 = vsel %vm325, %v354, 0.0
      %v361 = vadd.f32 %v359, %v360
      %v362 = vrot.slane %v361, 4
      %v363 = vadd.f32 %v361, %v362
      %v364 = vrot.slane %v363, 2
      %v365 = vadd.f32 %v363, %v364
      %v366 = vrot.slane %v365, 1
      %v367 = vadd.f32 %v365, %v366
      %v368 = vmul.f32 %v367, %v345
      %v369 = vadd.f32 %v368, 1e-05
      %v370 = vrsqrt.pop %v369
      %v371 = vmul.f32 %v370, %v369
      %v372 = vmul.f32 %v371, %v370
      %v373 = vmul.f32 0.5, %v372
      %v374 = vsub.f32 1.5, %v373
      %v375 = vmul.f32 %v370, %v374
      %vm376 = vweird.f32 %v369
      %vm377 = vweird.f32 %v370
      %vm378 = vmor %vm376, %vm377
      %v379 = vsel %vm378, %v370, %v375
      %v380 = vmul.f32 %v347, %v379
      %v381 = vmul.f32 %v348, %v379
      %v382 = vmul.f32 %v349, %v379
      %v383 = vmul.f32 %v350, %v379
      %384 = vset.pattern.permute.xlu0 1
      %385 = vperm.xlu0 %384, %v202
      %v386 = vpop.permute.xlu0 %385
      %388 = vset.pattern.permute.xlu0 1
      %389 = vperm.xlu0 %388, %v203
      %v390 = vpop.permute.xlu0 %389
      %392 = vset.pattern.permute.xlu0 1
      %393 = vperm.xlu0 %392, %v204
      %v394 = vpop.permute.xlu0 %393
      %396 = vset.pattern.permute.xlu0 1
      %397 = vperm.xlu0 %396, %v205
      %v398 = vpop.permute.xlu0 %397
      %v400 = vmul.f32 %v380, %v386
      %v401 = vmul.f32 %v381, %v390
      %v402 = vmul.f32 %v382, %v394
      %v403 = vmul.f32 %v383, %v398
      %404 = vset.pattern.permute.xlu0 2
      %405 = vperm.xlu0 %404, %v202
      %v406 = vpop.permute.xlu0 %405
      %408 = vset.pattern.permute.xlu0 2
      %409 = vperm.xlu0 %408, %v203
      %v410 = vpop.permute.xlu0 %409
      %412 = vset.pattern.permute.xlu0 2
      %413 = vperm.xlu0 %412, %v204
      %v414 = vpop.permute.xlu0 %413
      %416 = vset.pattern.permute.xlu0 2
      %417 = vperm.xlu0 %416, %v205
      %v418 = vpop.permute.xlu0 %417
      %v420 = vadd.f32 %v400, %v406
      %v421 = vadd.f32 %v401, %v410
      %v422 = vadd.f32 %v402, %v414
      %v423 = vadd.f32 %v403, %v418
      %v424 = vpack.c.bf16 %v420, %v420
      %v425 = vpack.c.bf16 %v421, %v421
      %v426 = vpack.c.bf16 %v422, %v422
      %v427 = vpack.c.bf16 %v423, %v423
      %vm428 = vcmask 60416
      %429 = vst.msk [vmem:[%s201] sm:$0xf] %vm428, %v424
      %430 = vst.msk [vmem:[%s201 + $0x4] sm:$0xf] %vm428, %v425
      %431 = vst.msk [vmem:[%s201 + $0x8] sm:$0xf] %vm428, %v426
      %432 = vst.msk [vmem:[%s201 + $0xc] sm:$0xf] %vm428, %v427
      %p433 = scmp.lt.s32.totalorder %s18, 1
      %s434 = scalar_select %p433, %s18, 1
      %p435 = scmp.lt.s32.totalorder %s19, 0
      %s436 = scalar_select %p435, %s19, 0
      %s437 = smul.addr %s434, 4
      %s438 = sadd.s32 %s436, %s437
      %s439 = smul.addr %s438, 4
      %s440 = scalar_lea.vmem %s3, %s439
      // Predicated region
      $region33: #{cross_scale_patch_embedding.4} parent=31 // pred_check
        %p441 = pneg %p116
      $region34: #{cross_scale_patch_embedding.4} parent=31 // pred_check_branch
        %443 = sbr.rel (%p441) target = $region36
      $region35: #{cross_scale_patch_embedding.4} parent=31 // pred_region
        _
      $region36: #{cross_scale_patch_embedding.4} parent=31 // pred_fallthru
        _
    $region32: #{cross_scale_patch_embedding.4} parent=5 // pred_fallthru
      _
    %p444 = scmp.le.s32.totalorder 2, %s9
    // Predicated region
    $region37: #{cross_scale_patch_embedding.4} parent=5 // pred_check
      %p445 = pneg %p444
    $region38: #{cross_scale_patch_embedding.4} parent=5 // pred_check_branch
      %447 = sbr.rel (%p445) target = $region40
    $region39: #{cross_scale_patch_embedding.4} parent=5 // pred_region
      %s448 = ssub.s32 %s9, 2
      // Predicated region
      $region41: #{cross_scale_patch_embedding.4} parent=39 // pred_check
        %p449 = pneg %p122
      $region42: #{cross_scale_patch_embedding.4} parent=39 // pred_check_branch
        %451 = sbr.rel (%p449) target = $region44
      $region43: #{cross_scale_patch_embedding.4} parent=39 // pred_region
        %p452 = scmp.lt.s32.totalorder %s20, 1
        %s453 = scalar_select %p452, %s20, 1
        %p454 = scmp.lt.s32.totalorder %s21, 0
        %s455 = scalar_select %p454, %s21, 0
        %s456 = smul.addr %s453, 4
        %s457 = sadd.s32 %s455, %s456
        %s458 = smul.addr %s457, 4
        %s459 = scalar_lea.vmem %s3, %s458
      $region44: #{cross_scale_patch_embedding.4} parent=39 // pred_fallthru
        _
    $region40: #{cross_scale_patch_embedding.4} parent=5 // pred_fallthru
      _
  $region6: #{cross_scale_patch_embedding.4} parent=0 // loop_footer
    %s13 = sadd.s32 1, %s9
  $region7: #{cross_scale_patch_embedding.4} parent=0 // loop_footer_branch
    %8 = sbr.rel target = $region3
  $region8: #{cross_scale_patch_embedding.4} parent=0 // loop_exit
    _

// kernel: cross_scale_patch_embedding.3
$region0: #{cross_scale_patch_embedding.3}
  #allocation0 [shape = 'u32[]', space=smem, size = 0x4, offset = 0x4, fixed_abs, tag = 'smem constant byte address 0x4 - core index']
  #allocation1 [shape = 'u32[72,128]{1,0:T(1,128)}', space=vmem, size = 0x9000, scoped, tag = 'internal scratch']
  %s0 = inlined_call_operand.vmem [shape: bf16[2,16,128], index: 0, kind: input, shape index: {}]
  %s1 = inlined_call_operand.vmem [shape: bf16[32,16], index: 1, kind: input, shape index: {}]
  %s2 = inlined_call_operand.vmem [shape: f32[32,8], index: 2, kind: input, shape index: {}]
  %s3 = inlined_call_operand.vmem [shape: bf16[2,32,128], index: 3, kind: output, shape index: {}]
  %s4 = sld [smem:[#allocation0]]
  $region45: #{cross_scale_patch_embedding.3} parent=0
    _
  %s6 = ssub.s32 1, %s4
  %s7 = scalar_select 0, %s6, %s4
  loop: start=0, step=1, limit=4
  $region2: #{cross_scale_patch_embedding.3} parent=0 // loop_pre_header
    _
  $region3: #{cross_scale_patch_embedding.3} parent=0 // loop_header
    %s9 = sphi 0, %s13
    %p10 = scmp.ge.s32.totalorder %s9, 4
    %s16 = sphi 0, %s28
    %s17 = sphi 0, %s24
    %s18 = sphi 0, %s16
    %s19 = sphi 0, %s17
    %s20 = sphi 0, %s18
    %s21 = sphi 0, %s19
    %s33 = sphi 0, %s35
    %s36 = sphi 0, %s33
    %s37 = sphi 0, %s36
    %s53 = sphi 0, %s37
    %s57 = sphi 0, %s57
    %s59 = sphi 0, %s57
    %s60 = sphi 0, %s59
    %s74 = sphi 0, %s60
    %s78 = sphi 0, %s78
    %s80 = sphi 0, %s78
    %s81 = sphi 0, %s80
    %s95 = sphi 0, %s81
    %s103 = sphi 0, %s105
    %s106 = sphi 0, %s103
    %s107 = sphi 0, %s106
    %s123 = sphi 0, %s107
  $region4: #{cross_scale_patch_embedding.3} parent=0 // loop_header_branch
    %12 = sbr.rel (%p10) target = $region8
  $region5: #{cross_scale_patch_embedding.3} parent=0 // loop_body
    %s14 = ssub.s32 %s9, 1
    %s15 = ssub.s32 %s9, 2
    %s22 = sadd.s32 1, %s17
    %p23 = scmp.ge.s32.totalorder %s22, 1
    %s24 = scalar_select %p23, 0, %s22
    %s25 = sadd.s32 1, %s16
    %s26 = scalar_select %p23, %s25, %s16
    %p27 = scmp.ge.s32.totalorder %s26, 2
    %s28 = scalar_select %p27, 0, %s26
    %s29 = ssub.s32 %s16, %s28
    %s30 = ssub.s32 %s17, %s24
    %s31 = sor.u32 %s29, %s30
    %p32 = scmp.eq.s32.totalorder %s31, 0
    %s34 = sadd.s32 %s33, 1
    %s35 = scalar_select %p32, %s33, %s34
    %p38 = pneg %p32
    %p39 = scmp.eq.s32.totalorder %s9, 1
    %p40 = por %p38, %p39
    %p41 = scmp.ne.s32.totalorder %s33, %s36
    %p42 = scmp.eq.s32.totalorder %s9, 0
    %p43 = por %p41, %p42
    %p44 = scmp.ne.s32.totalorder %s33, %s36
    %p45 = scmp.eq.s32.totalorder %s14, 1
    %p46 = por %p44, %p45
    %p47 = scmp.ne.s32.totalorder %s36, %s37
    %p48 = scmp.eq.s32.totalorder %s14, 0
    %p49 = por %p47, %p48
    %p50 = scmp.ne.s32.totalorder %s36, %s37
    %p51 = scmp.eq.s32.totalorder %s15, 1
    %p52 = por %p50, %p51
    %p54 = scmp.ne.s32.totalorder %s37, %s53
    %p55 = scmp.eq.s32.totalorder %s15, 0
    %p56 = por %p54, %p55
    %s58 = sadd.s32 %s57, 1
    %p61 = scmp.eq.s32.totalorder %s9, 1
    %p62 = scmp.ne.s32.totalorder %s57, %s59
    %p63 = scmp.eq.s32.totalorder %s9, 0
    %p64 = por %p62, %p63
    %p65 = scmp.ne.s32.totalorder %s57, %s59
    %p66 = scmp.eq.s32.totalorder %s14, 1
    %p67 = por %p65, %p66
    %p68 = scmp.ne.s32.totalorder %s59, %s60
    %p69 = scmp.eq.s32.totalorder %s14, 0
    %p70 = por %p68, %p69
    %p71 = scmp.ne.s32.totalorder %s59, %s60
    %p72 = scmp.eq.s32.totalorder %s15, 1
    %p73 = por %p71, %p72
    %p75 = scmp.ne.s32.totalorder %s60, %s74
    %p76 = scmp.eq.s32.totalorder %s15, 0
    %p77 = por %p75, %p76
    %s79 = sadd.s32 %s78, 1
    %p82 = scmp.eq.s32.totalorder %s9, 1
    %p83 = scmp.ne.s32.totalorder %s78, %s80
    %p84 = scmp.eq.s32.totalorder %s9, 0
    %p85 = por %p83, %p84
    %p86 = scmp.ne.s32.totalorder %s78, %s80
    %p87 = scmp.eq.s32.totalorder %s14, 1
    %p88 = por %p86, %p87
    %p89 = scmp.ne.s32.totalorder %s80, %s81
    %p90 = scmp.eq.s32.totalorder %s14, 0
    %p91 = por %p89, %p90
    %p92 = scmp.ne.s32.totalorder %s80, %s81
    %p93 = scmp.eq.s32.totalorder %s15, 1
    %p94 = por %p92, %p93
    %p96 = scmp.ne.s32.totalorder %s81, %s95
    %p97 = scmp.eq.s32.totalorder %s15, 0
    %p98 = por %p96, %p97
    %s99 = ssub.s32 %s16, %s28
    %s100 = ssub.s32 %s17, %s24
    %s101 = sor.u32 %s99, %s100
    %p102 = scmp.eq.s32.totalorder %s101, 0
    %s104 = sadd.s32 %s103, 1
    %s105 = scalar_select %p102, %s103, %s104
    %p108 = pneg %p102
    %p109 = scmp.eq.s32.totalorder %s9, 1
    %p110 = por %p108, %p109
    %p111 = scmp.ne.s32.totalorder %s103, %s106
    %p112 = scmp.eq.s32.totalorder %s9, 0
    %p113 = por %p111, %p112
    %p114 = scmp.ne.s32.totalorder %s103, %s106
    %p115 = scmp.eq.s32.totalorder %s14, 1
    %p116 = por %p114, %p115
    %p117 = scmp.ne.s32.totalorder %s106, %s107
    %p118 = scmp.eq.s32.totalorder %s14, 0
    %p119 = por %p117, %p118
    %p120 = scmp.ne.s32.totalorder %s106, %s107
    %p121 = scmp.eq.s32.totalorder %s15, 1
    %p122 = por %p120, %p121
    %p124 = scmp.ne.s32.totalorder %s107, %s123
    %p125 = scmp.eq.s32.totalorder %s15, 0
    %p126 = por %p124, %p125
    %p127 = scmp.le.s32.totalorder 1, %s9
    %p128 = scmp.lt.s32.totalorder %s9, 3
    %p129 = pnand %p127, %p128
    %p130 = pneg %p129
    // Predicated region
    $region9: #{cross_scale_patch_embedding.3} parent=5 // pred_check
      _
    $region10: #{cross_scale_patch_embedding.3} parent=5 // pred_check_branch
      %132 = sbr.rel (%p129) target = $region12
    $region11: #{cross_scale_patch_embedding.3} parent=5 // pred_region
      %s133 = ssub.s32 %s9, 1
      // Predicated region
      $region13: #{cross_scale_patch_embedding.3} parent=11 // pred_check
        %p134 = pneg %p70
      $region14: #{cross_scale_patch_embedding.3} parent=11 // pred_check_branch
        %136 = sbr.rel (%p134) target = $region16
      $region15: #{cross_scale_patch_embedding.3} parent=11 // pred_region
        _
      $region16: #{cross_scale_patch_embedding.3} parent=11 // pred_fallthru
        _
      // Predicated region
      $region17: #{cross_scale_patch_embedding.3} parent=11 // pred_check
        %p137 = pneg %p91
      $region18: #{cross_scale_patch_embedding.3} parent=11 // pred_check_branch
        %139 = sbr.rel (%p137) target = $region20
      $region19: #{cross_scale_patch_embedding.3} parent=11 // pred_region
        _
      $region20: #{cross_scale_patch_embedding.3} parent=11 // pred_fallthru
        _
    $region12: #{cross_scale_patch_embedding.3} parent=5 // pred_fallthru
      _
    %p140 = scmp.lt.s32.totalorder %s9, 2
    // Predicated region
    $region21: #{cross_scale_patch_embedding.3} parent=5 // pred_check
      %p141 = pneg %p140
    $region22: #{cross_scale_patch_embedding.3} parent=5 // pred_check_branch
      %143 = sbr.rel (%p141) target = $region24
    $region23: #{cross_scale_patch_embedding.3} parent=5 // pred_region
      // Predicated region
      $region25: #{cross_scale_patch_embedding.3} parent=23 // pred_check
        %p144 = pneg %p43
      $region26: #{cross_scale_patch_embedding.3} parent=23 // pred_check_branch
        %146 = sbr.rel (%p144) target = $region28
      $region27: #{cross_scale_patch_embedding.3} parent=23 // pred_region
        %p147 = scmp.lt.s32.totalorder %s16, 1
        %s148 = scalar_select %p147, %s16, 1
        %p149 = scmp.lt.s32.totalorder %s17, 0
        %s150 = scalar_select %p149, %s17, 0
        %s151 = smul.addr %s148, 2
        %s152 = sadd.s32 %s150, %s151
        %s153 = smul.addr %s152, 4
        %s154 = scalar_lea.vmem %s0, %s153
      $region28: #{cross_scale_patch_embedding.3} parent=23 // pred_fallthru
        _
    $region24: #{cross_scale_patch_embedding.3} parent=5 // pred_fallthru
      _
    %p155 = scmp.le.s32.totalorder 1, %s9
    %p156 = scmp.lt.s32.totalorder %s9, 3
    %p157 = pnand %p155, %p156
    %p158 = pneg %p157
    // Predicated region
    $region29: #{cross_scale_patch_embedding.3} parent=5 // pred_check
      _
    $region30: #{cross_scale_patch_embedding.3} parent=5 // pred_check_branch
      %160 = sbr.rel (%p157) target = $region32
    $region31: #{cross_scale_patch_embedding.3} parent=5 // pred_region
      %s161 = ssub.s32 %s9, 1
      %p162 = scmp.lt.s32.totalorder %s18, 1
      %s163 = scalar_select %p162, %s18, 1
      %p164 = scmp.lt.s32.totalorder %s19, 0
      %s165 = scalar_select %p164, %s19, 0
      %s166 = smul.addr %s163, 2
      %s167 = sadd.s32 %s165, %s166
      %s168 = smul.addr %s167, 4
      %s169 = scalar_lea.vmem %s0, %s168
      %p170 = pneg %p49
      %p171 = pneg %p46
      %p172 = pneg %p70
      %p173 = pneg %p67
      %p174 = pneg %p91
      %p175 = pneg %p88
      %p176 = pneg %p119
      %p177 = pneg %p116
      %p178 = scmp.lt.s32.totalorder %s18, 1
      %s179 = scalar_select %p178, %s18, 1
      %p180 = scmp.lt.s32.totalorder %s19, 0
      %s181 = scalar_select %p180, %s19, 0
      %s182 = smul.addr %s179, 4
      %s183 = sadd.s32 %s181, %s182
      %s184 = smul.addr %s183, 4
      %s185 = scalar_lea.vmem %s3, %s184
      %p186 = scmp.lt.s32.totalorder %s18, 1
      %s187 = scalar_select %p186, %s18, 1
      %p188 = scmp.lt.s32.totalorder %s19, 0
      %s189 = scalar_select %p188, %s19, 0
      %s190 = smul.addr %s187, 2
      %s191 = sadd.s32 %s189, %s190
      %s192 = smul.addr %s191, 4
      %s193 = scalar_lea.vmem %s0, %s192
      %p194 = scmp.lt.s32.totalorder %s18, 1
      %s195 = scalar_select %p194, %s18, 1
      %p196 = scmp.lt.s32.totalorder %s19, 0
      %s197 = scalar_select %p196, %s19, 0
      %s198 = smul.addr %s195, 4
      %s199 = sadd.s32 %s197, %s198
      %s200 = smul.addr %s199, 4
      %s201 = scalar_lea.vmem %s3, %s200
      %v203 = vld [vmem:[%s2] sm:$0xff]
      %v204 = vld [vmem:[%s2 + $0x8] sm:$0xff]
      %v205 = vld [vmem:[%s2 + $0x10] sm:$0xff]
      %v206 = vld [vmem:[%s2 + $0x18] sm:$0xff]
      %v207 = vld [vmem:[%s1] sm:$0xf]
      %v208 = vld [vmem:[%s1 + $0x4] sm:$0xf]
      %v209 = vld [vmem:[%s1 + $0x8] sm:$0xf]
      %v210 = vld [vmem:[%s1 + $0xc] sm:$0xf]
      %v211 = vld [vmem:[%s193] sm:$0xf]
      %v212 = vld [vmem:[%s193 + $0x4] sm:$0xf]
      %214 = vset.pattern.permute.xlu0 0
      %215 = vperm.xlu0 %214, %v203
      %v216 = vpop.permute.xlu0 %215
      %219 = vset.pattern.permute.xlu0 0
      %220 = vperm.xlu0 %219, %v204
      %v221 = vpop.permute.xlu0 %220
      %224 = vset.pattern.permute.xlu0 0
      %225 = vperm.xlu0 %224, %v205
      %v226 = vpop.permute.xlu0 %225
      %229 = vset.pattern.permute.xlu0 0
      %230 = vperm.xlu0 %229, %v206
      %v231 = vpop.permute.xlu0 %230
      %v237 = vunpack.c.l.b16 %v207
      %v238 = vunpack.c.l.b16 %v208
      %v239 = vunpack.c.l.b16 %v209
      %v240 = vunpack.c.l.b16 %v210
      %v241 = vpack.c.b16 %v238, %v237
      %v242 = vpack.c.b16 %v240, %v239
      %v245 = vunpack.c.l.b16 %v211
      %v246 = vunpack.c.l.b16 %v212
      %v247 = vpack.c.b16 %v246, %v245
      %vm249 = vcmask 130048
      %v251 = vsel %vm249, %v241, 0
      %v254 = vsel %vm249, %v242, 0
      %256 = vmatpush.bf16.msra.mxu0 0
      %257 = vmatpush.bf16.msra.mxu0 0
      %258 = vmatpush.bf16.msra.mxu0 0
      %259 = vmatpush.bf16.msra.mxu0 0
      %260 = vmatpush.bf16.msra.mxu0 0
      %261 = vmatpush.bf16.msra.mxu0 0
      %262 = vmatpush.bf16.msra.mxu0 0
      %263 = vmatpush.bf16.msra.mxu0 %v247
      %264 = vmatmul.bf16.gmra.mxu0 %v251
      %v265 = vpop.f32.mrf.mxu0
      %v266 = vadd.f32 %v216, %v265
      %v267 = vpop.f32.mrf.mxu0
      %v268 = vadd.f32 %v221, %v267
      %269 = vmatmul.bf16.gmra.mxu0 %v254
      %v270 = vpop.f32.mrf.mxu0
      %v271 = vadd.f32 %v226, %v270
      %v272 = vpop.f32.mrf.mxu0
      %v273 = vadd.f32 %v231, %v272
      %274 = vdwg.mxu0
      %v275 = vadd.f32 %v266, %v268
      %v276 = vadd.f32 %v275, %v271
      %v277 = vadd.f32 %v276, %v273
      %v278 = vrot.slane %v277, 4
      %v279 = vadd.f32 %v277, %v278
      %v280 = vrot.slane %v279, 2
      %v281 = vadd.f32 %v279, %v280
      %v282 = vrot.slane %v281, 1
      %v283 = vadd.f32 %v281, %v282
      %v284 = vrcp.pop 32.0
      %v285 = vmul.f32 32.0, %v284
      %v286 = vsub.f32 1.0, %v285
      %v287 = vmul.f32 %v284, %v286
      %v288 = vadd.f32 %v284, %v287
      %vm289 = vweird.f32 %v284
      %v290 = vsel %vm289, %v284, %v288
      %v291 = vmul.f32 %v283, %v290
      %v292 = vsub.f32 %v266, %v291
      %v293 = vsub.f32 %v268, %v291
      %v294 = vsub.f32 %v271, %v291
      %v295 = vsub.f32 %v273, %v291
      %v296 = vmul.f32 %v292, %v292
      %v297 = vmul.f32 %v293, %v293
      %v298 = vmul.f32 %v294, %v294
      %v299 = vmul.f32 %v295, %v295
      %v300 = vadd.f32 %v296, %v297
      %v301 = vadd.f32 %v300, %v298
      %v302 = vadd.f32 %v301, %v299
      %v303 = vrot.slane %v302, 4
      %v304 = vadd.f32 %v302, %v303
      %v305 = vrot.slane %v304, 2
      %v306 = vadd.f32 %v304, %v305
      %v307 = vrot.slane %v306, 1
      %v308 = vadd.f32 %v306, %v307
      %v309 = vmul.f32 %v308, %v290
      %v310 = vadd.f32 %v309, 1e-05
      %v311 = vrsqrt.pop %v310
      %v312 = vmul.f32 %v311, %v310
      %v313 = vmul.f32 %v312, %v311
      %v314 = vmul.f32 0.5, %v313
      %v315 = vsub.f32 1.5, %v314
      %v316 = vmul.f32 %v311, %v315
      %vm317 = vweird.f32 %v310
      %vm318 = vweird.f32 %v311
      %vm319 = vmor %vm317, %vm318
      %v320 = vsel %vm319, %v311, %v316
      %v321 = vmul.f32 %v292, %v320
      %v322 = vmul.f32 %v293, %v320
      %v323 = vmul.f32 %v294, %v320
      %v324 = vmul.f32 %v295, %v320
      %325 = vset.pattern.permute.xlu0 1
      %326 = vperm.xlu0 %325, %v203
      %v327 = vpop.permute.xlu0 %326
      %329 = vset.pattern.permute.xlu0 1
      %330 = vperm.xlu0 %329, %v204
      %v331 = vpop.permute.xlu0 %330
      %333 = vset.pattern.permute.xlu0 1
      %334 = vperm.xlu0 %333, %v205
      %v335 = vpop.permute.xlu0 %334
      %337 = vset.pattern.permute.xlu0 1
      %338 = vperm.xlu0 %337, %v206
      %v339 = vpop.permute.xlu0 %338
      %v341 = vmul.f32 %v321, %v327
      %v342 = vmul.f32 %v322, %v331
      %v343 = vmul.f32 %v323, %v335
      %v344 = vmul.f32 %v324, %v339
      %345 = vset.pattern.permute.xlu0 2
      %346 = vperm.xlu0 %345, %v203
      %v347 = vpop.permute.xlu0 %346
      %349 = vset.pattern.permute.xlu0 2
      %350 = vperm.xlu0 %349, %v204
      %v351 = vpop.permute.xlu0 %350
      %353 = vset.pattern.permute.xlu0 2
      %354 = vperm.xlu0 %353, %v205
      %v355 = vpop.permute.xlu0 %354
      %357 = vset.pattern.permute.xlu0 2
      %358 = vperm.xlu0 %357, %v206
      %v359 = vpop.permute.xlu0 %358
      %v361 = vadd.f32 %v341, %v347
      %v362 = vadd.f32 %v342, %v351
      %v363 = vadd.f32 %v343, %v355
      %v364 = vadd.f32 %v344, %v359
      %v365 = vpack.c.bf16 %v361, %v361
      %v366 = vpack.c.bf16 %v362, %v362
      %v367 = vpack.c.bf16 %v363, %v363
      %v368 = vpack.c.bf16 %v364, %v364
      %369 = vst [vmem:[%s201] sm:$0xf] %v365
      %370 = vst [vmem:[%s201 + $0x4] sm:$0xf] %v366
      %371 = vst [vmem:[%s201 + $0x8] sm:$0xf] %v367
      %372 = vst [vmem:[%s201 + $0xc] sm:$0xf] %v368
      %p373 = scmp.lt.s32.totalorder %s18, 1
      %s374 = scalar_select %p373, %s18, 1
      %p375 = scmp.lt.s32.totalorder %s19, 0
      %s376 = scalar_select %p375, %s19, 0
      %s377 = smul.addr %s374, 4
      %s378 = sadd.s32 %s376, %s377
      %s379 = smul.addr %s378, 4
      %s380 = scalar_lea.vmem %s3, %s379
      // Predicated region
      $region33: #{cross_scale_patch_embedding.3} parent=31 // pred_check
        %p381 = pneg %p116
      $region34: #{cross_scale_patch_embedding.3} parent=31 // pred_check_branch
        %383 = sbr.rel (%p381) target = $region36
      $region35: #{cross_scale_patch_embedding.3} parent=31 // pred_region
        _
      $region36: #{cross_scale_patch_embedding.3} parent=31 // pred_fallthru
        _
    $region32: #{cross_scale_patch_embedding.3} parent=5 // pred_fallthru
      _
    %p384 = scmp.le.s32.totalorder 2, %s9
    // Predicated region
    $region37: #{cross_scale_patch_embedding.3} parent=5 // pred_check
      %p385 = pneg %p384
    $region38: #{cross_scale_patch_embedding.3} parent=5 // pred_check_branch
      %387 = sbr.rel (%p385) target = $region40
    $region39: #{cross_scale_patch_embedding.3} parent=5 // pred_region
      %s388 = ssub.s32 %s9, 2
      // Predicated region
      $region41: #{cross_scale_patch_embedding.3} parent=39 // pred_check
        %p389 = pneg %p122
      $region42: #{cross_scale_patch_embedding.3} parent=39 // pred_check_branch
        %391 = sbr.rel (%p389) target = $region44
      $region43: #{cross_scale_patch_embedding.3} parent=39 // pred_region
        %p392 = scmp.lt.s32.totalorder %s20, 1
        %s393 = scalar_select %p392, %s20, 1
        %p394 = scmp.lt.s32.totalorder %s21, 0
        %s395 = scalar_select %p394, %s21, 0
        %s396 = smul.addr %s393, 4
        %s397 = sadd.s32 %s395, %s396
        %s398 = smul.addr %s397, 4
        %s399 = scalar_lea.vmem %s3, %s398
      $region44: #{cross_scale_patch_embedding.3} parent=39 // pred_fallthru
        _
    $region40: #{cross_scale_patch_embedding.3} parent=5 // pred_fallthru
      _
  $region6: #{cross_scale_patch_embedding.3} parent=0 // loop_footer
    %s13 = sadd.s32 1, %s9
  $region7: #{cross_scale_patch_embedding.3} parent=0 // loop_footer_branch
    %8 = sbr.rel target = $region3
  $region8: #{cross_scale_patch_embedding.3} parent=0 // loop_exit
    _

// kernel: cross_scale_patch_embedding.5
$region0: #{cross_scale_patch_embedding.5}
  #allocation0 [shape = 'u32[]', space=smem, size = 0x4, offset = 0x4, fixed_abs, tag = 'smem constant byte address 0x4 - core index']
  #allocation1 [shape = 'u32[72,128]{1,0:T(1,128)}', space=vmem, size = 0x9000, scoped, tag = 'internal scratch']
  %s0 = inlined_call_operand.vmem [shape: bf16[2,1024,2], index: 0, kind: input, shape index: {}]
  %s1 = inlined_call_operand.vmem [shape: bf16[32,1024], index: 1, kind: input, shape index: {}]
  %s2 = inlined_call_operand.vmem [shape: f32[32,8], index: 2, kind: input, shape index: {}]
  %s3 = inlined_call_operand.vmem [shape: bf16[2,32,2], index: 3, kind: output, shape index: {}]
  %s4 = sld [smem:[#allocation0]]
  $region45: #{cross_scale_patch_embedding.5} parent=0
    _
  %s6 = ssub.s32 1, %s4
  %s7 = scalar_select 0, %s6, %s4
  loop: start=0, step=1, limit=4
  $region2: #{cross_scale_patch_embedding.5} parent=0 // loop_pre_header
    _
  $region3: #{cross_scale_patch_embedding.5} parent=0 // loop_header
    %s9 = sphi 0, %s13
    %p10 = scmp.ge.s32.totalorder %s9, 4
    %s16 = sphi 0, %s28
    %s17 = sphi 0, %s24
    %s18 = sphi 0, %s16
    %s19 = sphi 0, %s17
    %s20 = sphi 0, %s18
    %s21 = sphi 0, %s19
    %s33 = sphi 0, %s35
    %s36 = sphi 0, %s33
    %s37 = sphi 0, %s36
    %s53 = sphi 0, %s37
    %s57 = sphi 0, %s57
    %s59 = sphi 0, %s57
    %s60 = sphi 0, %s59
    %s74 = sphi 0, %s60
    %s78 = sphi 0, %s78
    %s80 = sphi 0, %s78
    %s81 = sphi 0, %s80
    %s95 = sphi 0, %s81
    %s103 = sphi 0, %s105
    %s106 = sphi 0, %s103
    %s107 = sphi 0, %s106
    %s123 = sphi 0, %s107
  $region4: #{cross_scale_patch_embedding.5} parent=0 // loop_header_branch
    %12 = sbr.rel (%p10) target = $region8
  $region5: #{cross_scale_patch_embedding.5} parent=0 // loop_body
    %s14 = ssub.s32 %s9, 1
    %s15 = ssub.s32 %s9, 2
    %s22 = sadd.s32 1, %s17
    %p23 = scmp.ge.s32.totalorder %s22, 1
    %s24 = scalar_select %p23, 0, %s22
    %s25 = sadd.s32 1, %s16
    %s26 = scalar_select %p23, %s25, %s16
    %p27 = scmp.ge.s32.totalorder %s26, 2
    %s28 = scalar_select %p27, 0, %s26
    %s29 = ssub.s32 %s16, %s28
    %s30 = ssub.s32 %s17, %s24
    %s31 = sor.u32 %s29, %s30
    %p32 = scmp.eq.s32.totalorder %s31, 0
    %s34 = sadd.s32 %s33, 1
    %s35 = scalar_select %p32, %s33, %s34
    %p38 = pneg %p32
    %p39 = scmp.eq.s32.totalorder %s9, 1
    %p40 = por %p38, %p39
    %p41 = scmp.ne.s32.totalorder %s33, %s36
    %p42 = scmp.eq.s32.totalorder %s9, 0
    %p43 = por %p41, %p42
    %p44 = scmp.ne.s32.totalorder %s33, %s36
    %p45 = scmp.eq.s32.totalorder %s14, 1
    %p46 = por %p44, %p45
    %p47 = scmp.ne.s32.totalorder %s36, %s37
    %p48 = scmp.eq.s32.totalorder %s14, 0
    %p49 = por %p47, %p48
    %p50 = scmp.ne.s32.totalorder %s36, %s37
    %p51 = scmp.eq.s32.totalorder %s15, 1
    %p52 = por %p50, %p51
    %p54 = scmp.ne.s32.totalorder %s37, %s53
    %p55 = scmp.eq.s32.totalorder %s15, 0
    %p56 = por %p54, %p55
    %s58 = sadd.s32 %s57, 1
    %p61 = scmp.eq.s32.totalorder %s9, 1
    %p62 = scmp.ne.s32.totalorder %s57, %s59
    %p63 = scmp.eq.s32.totalorder %s9, 0
    %p64 = por %p62, %p63
    %p65 = scmp.ne.s32.totalorder %s57, %s59
    %p66 = scmp.eq.s32.totalorder %s14, 1
    %p67 = por %p65, %p66
    %p68 = scmp.ne.s32.totalorder %s59, %s60
    %p69 = scmp.eq.s32.totalorder %s14, 0
    %p70 = por %p68, %p69
    %p71 = scmp.ne.s32.totalorder %s59, %s60
    %p72 = scmp.eq.s32.totalorder %s15, 1
    %p73 = por %p71, %p72
    %p75 = scmp.ne.s32.totalorder %s60, %s74
    %p76 = scmp.eq.s32.totalorder %s15, 0
    %p77 = por %p75, %p76
    %s79 = sadd.s32 %s78, 1
    %p82 = scmp.eq.s32.totalorder %s9, 1
    %p83 = scmp.ne.s32.totalorder %s78, %s80
    %p84 = scmp.eq.s32.totalorder %s9, 0
    %p85 = por %p83, %p84
    %p86 = scmp.ne.s32.totalorder %s78, %s80
    %p87 = scmp.eq.s32.totalorder %s14, 1
    %p88 = por %p86, %p87
    %p89 = scmp.ne.s32.totalorder %s80, %s81
    %p90 = scmp.eq.s32.totalorder %s14, 0
    %p91 = por %p89, %p90
    %p92 = scmp.ne.s32.totalorder %s80, %s81
    %p93 = scmp.eq.s32.totalorder %s15, 1
    %p94 = por %p92, %p93
    %p96 = scmp.ne.s32.totalorder %s81, %s95
    %p97 = scmp.eq.s32.totalorder %s15, 0
    %p98 = por %p96, %p97
    %s99 = ssub.s32 %s16, %s28
    %s100 = ssub.s32 %s17, %s24
    %s101 = sor.u32 %s99, %s100
    %p102 = scmp.eq.s32.totalorder %s101, 0
    %s104 = sadd.s32 %s103, 1
    %s105 = scalar_select %p102, %s103, %s104
    %p108 = pneg %p102
    %p109 = scmp.eq.s32.totalorder %s9, 1
    %p110 = por %p108, %p109
    %p111 = scmp.ne.s32.totalorder %s103, %s106
    %p112 = scmp.eq.s32.totalorder %s9, 0
    %p113 = por %p111, %p112
    %p114 = scmp.ne.s32.totalorder %s103, %s106
    %p115 = scmp.eq.s32.totalorder %s14, 1
    %p116 = por %p114, %p115
    %p117 = scmp.ne.s32.totalorder %s106, %s107
    %p118 = scmp.eq.s32.totalorder %s14, 0
    %p119 = por %p117, %p118
    %p120 = scmp.ne.s32.totalorder %s106, %s107
    %p121 = scmp.eq.s32.totalorder %s15, 1
    %p122 = por %p120, %p121
    %p124 = scmp.ne.s32.totalorder %s107, %s123
    %p125 = scmp.eq.s32.totalorder %s15, 0
    %p126 = por %p124, %p125
    %p127 = scmp.le.s32.totalorder 1, %s9
    %p128 = scmp.lt.s32.totalorder %s9, 3
    %p129 = pnand %p127, %p128
    %p130 = pneg %p129
    // Predicated region
    $region9: #{cross_scale_patch_embedding.5} parent=5 // pred_check
      _
    $region10: #{cross_scale_patch_embedding.5} parent=5 // pred_check_branch
      %132 = sbr.rel (%p129) target = $region12
    $region11: #{cross_scale_patch_embedding.5} parent=5 // pred_region
      %s133 = ssub.s32 %s9, 1
      // Predicated region
      $region13: #{cross_scale_patch_embedding.5} parent=11 // pred_check
        %p134 = pneg %p70
      $region14: #{cross_scale_patch_embedding.5} parent=11 // pred_check_branch
        %136 = sbr.rel (%p134) target = $region16
      $region15: #{cross_scale_patch_embedding.5} parent=11 // pred_region
        _
      $region16: #{cross_scale_patch_embedding.5} parent=11 // pred_fallthru
        _
      // Predicated region
      $region17: #{cross_scale_patch_embedding.5} parent=11 // pred_check
        %p137 = pneg %p91
      $region18: #{cross_scale_patch_embedding.5} parent=11 // pred_check_branch
        %139 = sbr.rel (%p137) target = $region20
      $region19: #{cross_scale_patch_embedding.5} parent=11 // pred_region
        _
      $region20: #{cross_scale_patch_embedding.5} parent=11 // pred_fallthru
        _
    $region12: #{cross_scale_patch_embedding.5} parent=5 // pred_fallthru
      _
    %p140 = scmp.lt.s32.totalorder %s9, 2
    // Predicated region
    $region21: #{cross_scale_patch_embedding.5} parent=5 // pred_check
      %p141 = pneg %p140
    $region22: #{cross_scale_patch_embedding.5} parent=5 // pred_check_branch
      %143 = sbr.rel (%p141) target = $region24
    $region23: #{cross_scale_patch_embedding.5} parent=5 // pred_region
      // Predicated region
      $region25: #{cross_scale_patch_embedding.5} parent=23 // pred_check
        %p144 = pneg %p43
      $region26: #{cross_scale_patch_embedding.5} parent=23 // pred_check_branch
        %146 = sbr.rel (%p144) target = $region28
      $region27: #{cross_scale_patch_embedding.5} parent=23 // pred_region
        %p147 = scmp.lt.s32.totalorder %s16, 1
        %s148 = scalar_select %p147, %s16, 1
        %p149 = scmp.lt.s32.totalorder %s17, 0
        %s150 = scalar_select %p149, %s17, 0
        %s151 = smul.addr %s148, 128
        %s152 = sadd.s32 %s150, %s151
        %s153 = smul.addr %s152, 4
        %s154 = scalar_lea.vmem %s0, %s153
      $region28: #{cross_scale_patch_embedding.5} parent=23 // pred_fallthru
        _
    $region24: #{cross_scale_patch_embedding.5} parent=5 // pred_fallthru
      _
    %p155 = scmp.le.s32.totalorder 1, %s9
    %p156 = scmp.lt.s32.totalorder %s9, 3
    %p157 = pnand %p155, %p156
    %p158 = pneg %p157
    // Predicated region
    $region29: #{cross_scale_patch_embedding.5} parent=5 // pred_check
      _
    $region30: #{cross_scale_patch_embedding.5} parent=5 // pred_check_branch
      %160 = sbr.rel (%p157) target = $region32
    $region31: #{cross_scale_patch_embedding.5} parent=5 // pred_region
      %s161 = ssub.s32 %s9, 1
      %p162 = scmp.lt.s32.totalorder %s18, 1
      %s163 = scalar_select %p162, %s18, 1
      %p164 = scmp.lt.s32.totalorder %s19, 0
      %s165 = scalar_select %p164, %s19, 0
      %s166 = smul.addr %s163, 128
      %s167 = sadd.s32 %s165, %s166
      %s168 = smul.addr %s167, 4
      %s169 = scalar_lea.vmem %s0, %s168
      %p170 = pneg %p49
      %p171 = pneg %p46
      %p172 = pneg %p70
      %p173 = pneg %p67
      %p174 = pneg %p91
      %p175 = pneg %p88
      %p176 = pneg %p119
      %p177 = pneg %p116
      %p178 = scmp.lt.s32.totalorder %s18, 1
      %s179 = scalar_select %p178, %s18, 1
      %p180 = scmp.lt.s32.totalorder %s19, 0
      %s181 = scalar_select %p180, %s19, 0
      %s182 = smul.addr %s179, 4
      %s183 = sadd.s32 %s181, %s182
      %s184 = smul.addr %s183, 4
      %s185 = scalar_lea.vmem %s3, %s184
      %p186 = scmp.lt.s32.totalorder %s18, 1
      %s187 = scalar_select %p186, %s18, 1
      %p188 = scmp.lt.s32.totalorder %s19, 0
      %s189 = scalar_select %p188, %s19, 0
      %s190 = smul.addr %s187, 128
      %s191 = sadd.s32 %s189, %s190
      %s192 = smul.addr %s191, 4
      %s193 = scalar_lea.vmem %s0, %s192
      %p194 = scmp.lt.s32.totalorder %s18, 1
      %s195 = scalar_select %p194, %s18, 1
      %p196 = scmp.lt.s32.totalorder %s19, 0
      %s197 = scalar_select %p196, %s19, 0
      %s198 = smul.addr %s195, 4
      %s199 = sadd.s32 %s197, %s198
      %s200 = smul.addr %s199, 4
      %s201 = scalar_lea.vmem %s3, %s200
      %v202 = vld [vmem:[%s2] sm:$0xff]
      %v203 = vld [vmem:[%s2 + $0x8] sm:$0xff]
      %v204 = vld [vmem:[%s2 + $0x10] sm:$0xff]
      %v205 = vld [vmem:[%s2 + $0x18] sm:$0xff]
      %v206 = vld [vmem:[%s1] sm:$0xff]
      %v207 = vld [vmem:[%s1 + $0x8] sm:$0xff]
      %v208 = vld [vmem:[%s1 + $0x10] sm:$0xff]
      %v209 = vld [vmem:[%s1 + $0x18] sm:$0xff]
      %v210 = vld [vmem:[%s1 + $0x20] sm:$0xff]
      %v211 = vld [vmem:[%s1 + $0x28] sm:$0xff]
      %v212 = vld [vmem:[%s1 + $0x30] sm:$0xff]
      %v213 = vld [vmem:[%s1 + $0x38] sm:$0xff]
      %v214 = vld [vmem:[%s1 + $0x40] sm:$0xff]
      %v215 = vld [vmem:[%s1 + $0x48] sm:$0xff]
      %v216 = vld [vmem:[%s1 + $0x50] sm:$0xff]
      %v217 = vld [vmem:[%s1 + $0x58] sm:$0xff]
      %v218 = vld [vmem:[%s1 + $0x60] sm:$0xff]
      %v219 = vld [vmem:[%s1 + $0x68] sm:$0xff]
      %v220 = vld [vmem:[%s1 + $0x70] sm:$0xff]
      %v221 = vld [vmem:[%s1 + $0x78] sm:$0xff]
      %v222 = vld [vmem:[%s193] sm:$0xf]
      %v223 = vld [vmem:[%s193 + $0x4] sm:$0xf]
      %v224 = vld [vmem:[%s193 + $0x8] sm:$0xf]
      %v225 = vld [vmem:[%s193 + $0xc] sm:$0xf]
      %v226 = vld [vmem:[%s193 + $0x10] sm:$0xf]
      %v227 = vld [vmem:[%s193 + $0x14] sm:$0xf]
      %v228 = vld [vmem:[%s193 + $0x18] sm:$0xf]
      %v229 = vld [vmem:[%s193 + $0x1c] sm:$0xf]
      %v230 = vld [vmem:[%s193 + $0x20] sm:$0xf]
      %v231 = vld [vmem:[%s193 + $0x24] sm:$0xf]
      %v232 = vld [vmem:[%s193 + $0x28] sm:$0xf]
      %v233 = vld [vmem:[%s193 + $0x2c] sm:$0xf]
      %v234 = vld [vmem:[%s193 + $0x30] sm:$0xf]
      %v235 = vld [vmem:[%s193 + $0x34] sm:$0xf]
      %v236 = vld [vmem:[%s193 + $0x38] sm:$0xf]
      %v237 = vld [vmem:[%s193 + $0x3c] sm:$0xf]
      %v238 = vld [vmem:[%s193 + $0x40] sm:$0xf]
      %v239 = vld [vmem:[%s193 + $0x44] sm:$0xf]
      %v240 = vld [vmem:[%s193 + $0x48] sm:$0xf]
      %v241 = vld [vmem:[%s193 + $0x4c] sm:$0xf]
      %v242 = vld [vmem:[%s193 + $0x50] sm:$0xf]
      %v243 = vld [vmem:[%s193 + $0x54] sm:$0xf]
      %v244 = vld [vmem:[%s193 + $0x58] sm:$0xf]
      %v245 = vld [vmem:[%s193 + $0x5c] sm:$0xf]
      %v246 = vld [vmem:[%s193 + $0x60] sm:$0xf]
      %v247 = vld [vmem:[%s193 + $0x64] sm:$0xf]
      %v248 = vld [vmem:[%s193 + $0x68] sm:$0xf]
      %v249 = vld [vmem:[%s193 + $0x6c] sm:$0xf]
      %v250 = vld [vmem:[%s193 + $0x70] sm:$0xf]
      %v251 = vld [vmem:[%s193 + $0x74] sm:$0xf]
      %v252 = vld [vmem:[%s193 + $0x78] sm:$0xf]
      %v253 = vld [vmem:[%s193 + $0x7c] sm:$0xf]
      %v254 = vld [vmem:[%s193 + $0x80] sm:$0xf]
      %v255 = vld [vmem:[%s193 + $0x84] sm:$0xf]
      %v256 = vld [vmem:[%s193 + $0x88] sm:$0xf]
      %v257 = vld [vmem:[%s193 + $0x8c] sm:$0xf]
      %v258 = vld [vmem:[%s193 + $0x90] sm:$0xf]
      %v259 = vld [vmem:[%s193 + $0x94] sm:$0xf]
      %v260 = vld [vmem:[%s193 + $0x98] sm:$0xf]
      %v261 = vld [vmem:[%s193 + $0x9c] sm:$0xf]
      %v262 = vld [vmem:[%s193 + $0xa0] sm:$0xf]
      %v263 = vld [vmem:[%s193 + $0xa4] sm:$0xf]
      %v264 = vld [vmem:[%s193 + $0xa8] sm:$0xf]
      %v265 = vld [vmem:[%s193 + $0xac] sm:$0xf]
      %v266 = vld [vmem:[%s193 + $0xb0] sm:$0xf]
      %v267 = vld [vmem:[%s193 + $0xb4] sm:$0xf]
      %v268 = vld [vmem:[%s193 + $0xb8] sm:$0xf]
      %v269 = vld [vmem:[%s193 + $0xbc] sm:$0xf]
      %v270 = vld [vmem:[%s193 + $0xc0] sm:$0xf]
      %v271 = vld [vmem:[%s193 + $0xc4] sm:$0xf]
      %v272 = vld [vmem:[%s193 + $0xc8] sm:$0xf]
      %v273 = vld [vmem:[%s193 + $0xcc] sm:$0xf]
      %v274 = vld [vmem:[%s193 + $0xd0] sm:$0xf]
      %v275 = vld [vmem:[%s193 + $0xd4] sm:$0xf]
      %v276 = vld [vmem:[%s193 + $0xd8] sm:$0xf]
      %v277 = vld [vmem:[%s193 + $0xdc] sm:$0xf]
      %v278 = vld [vmem:[%s193 + $0xe0] sm:$0xf]
      %v279 = vld [vmem:[%s193 + $0xe4] sm:$0xf]
      %v280 = vld [vmem:[%s193 + $0xe8] sm:$0xf]
      %v281 = vld [vmem:[%s193 + $0xec] sm:$0xf]
      %v282 = vld [vmem:[%s193 + $0xf0] sm:$0xf]
      %v283 = vld [vmem:[%s193 + $0xf4] sm:$0xf]
      %v284 = vld [vmem:[%s193 + $0xf8] sm:$0xf]
      %v285 = vld [vmem:[%s193 + $0xfc] sm:$0xf]
      %v286 = vld [vmem:[%s193 + $0x100] sm:$0xf]
      %v287 = vld [vmem:[%s193 + $0x104] sm:$0xf]
      %v288 = vld [vmem:[%s193 + $0x108] sm:$0xf]
      %v289 = vld [vmem:[%s193 + $0x10c] sm:$0xf]
      %v290 = vld [vmem:[%s193 + $0x110] sm:$0xf]
      %v291 = vld [vmem:[%s193 + $0x114] sm:$0xf]
      %v292 = vld [vmem:[%s193 + $0x118] sm:$0xf]
      %v293 = vld [vmem:[%s193 + $0x11c] sm:$0xf]
      %v294 = vld [vmem:[%s193 + $0x120] sm:$0xf]
      %v295 = vld [vmem:[%s193 + $0x124] sm:$0xf]
      %v296 = vld [vmem:[%s193 + $0x128] sm:$0xf]
      %v297 = vld [vmem:[%s193 + $0x12c] sm:$0xf]
      %v298 = vld [vmem:[%s193 + $0x130] sm:$0xf]
      %v299 = vld [vmem:[%s193 + $0x134] sm:$0xf]
      %v300 = vld [vmem:[%s193 + $0x138] sm:$0xf]
      %v301 = vld [vmem:[%s193 + $0x13c] sm:$0xf]
      %v302 = vld [vmem:[%s193 + $0x140] sm:$0xf]
      %v303 = vld [vmem:[%s193 + $0x144] sm:$0xf]
      %v304 = vld [vmem:[%s193 + $0x148] sm:$0xf]
      %v305 = vld [vmem:[%s193 + $0x14c] sm:$0xf]
      %v306 = vld [vmem:[%s193 + $0x150] sm:$0xf]
      %v307 = vld [vmem:[%s193 + $0x154] sm:$0xf]
      %v308 = vld [vmem:[%s193 + $0x158] sm:$0xf]
      %v309 = vld [vmem:[%s193 + $0x15c] sm:$0xf]
      %v310 = vld [vmem:[%s193 + $0x160] sm:$0xf]
      %v311 = vld [vmem:[%s193 + $0x164] sm:$0xf]
      %v312 = vld [vmem:[%s193 + $0x168] sm:$0xf]
      %v313 = vld [vmem:[%s193 + $0x16c] sm:$0xf]
      %v314 = vld [vmem:[%s193 + $0x170] sm:$0xf]
      %v315 = vld [vmem:[%s193 + $0x174] sm:$0xf]
      %v316 = vld [vmem:[%s193 + $0x178] sm:$0xf]
      %v317 = vld [vmem:[%s193 + $0x17c] sm:$0xf]
      %v318 = vld [vmem:[%s193 + $0x180] sm:$0xf]
      %v319 = vld [vmem:[%s193 + $0x184] sm:$0xf]
      %v320 = vld [vmem:[%s193 + $0x188] sm:$0xf]
      %v321 = vld [vmem:[%s193 + $0x18c] sm:$0xf]
      %v322 = vld [vmem:[%s193 + $0x190] sm:$0xf]
      %v323 = vld [vmem:[%s193 + $0x194] sm:$0xf]
      %v324 = vld [vmem:[%s193 + $0x198] sm:$0xf]
      %v325 = vld [vmem:[%s193 + $0x19c] sm:$0xf]
      %v326 = vld [vmem:[%s193 + $0x1a0] sm:$0xf]
      %v327 = vld [vmem:[%s193 + $0x1a4] sm:$0xf]
      %v328 = vld [vmem:[%s193 + $0x1a8] sm:$0xf]
      %v329 = vld [vmem:[%s193 + $0x1ac] sm:$0xf]
      %v330 = vld [vmem:[%s193 + $0x1b0] sm:$0xf]
      %v331 = vld [vmem:[%s193 + $0x1b4] sm:$0xf]
      %v332 = vld [vmem:[%s193 + $0x1b8] sm:$0xf]
      %v333 = vld [vmem:[%s193 + $0x1bc] sm:$0xf]
      %v334 = vld [vmem:[%s193 + $0x1c0] sm:$0xf]
      %v335 = vld [vmem:[%s193 + $0x1c4] sm:$0xf]
      %v336 = vld [vmem:[%s193 + $0x1c8] sm:$0xf]
      %v337 = vld [vmem:[%s193 + $0x1cc] sm:$0xf]
      %v338 = vld [vmem:[%s193 + $0x1d0] sm:$0xf]
      %v339 = vld [vmem:[%s193 + $0x1d4] sm:$0xf]
      %v340 = vld [vmem:[%s193 + $0x1d8] sm:$0xf]
      %v341 = vld [vmem:[%s193 + $0x1dc] sm:$0xf]
      %v342 = vld [vmem:[%s193 + $0x1e0] sm:$0xf]
      %v343 = vld [vmem:[%s193 + $0x1e4] sm:$0xf]
      %v344 = vld [vmem:[%s193 + $0x1e8] sm:$0xf]
      %v345 = vld [vmem:[%s193 + $0x1ec] sm:$0xf]
      %v346 = vld [vmem:[%s193 + $0x1f0] sm:$0xf]
      %v347 = vld [vmem:[%s193 + $0x1f4] sm:$0xf]
      %v348 = vld [vmem:[%s193 + $0x1f8] sm:$0xf]
      %v349 = vld [vmem:[%s193 + $0x1fc] sm:$0xf]
      %351 = vset.pattern.permute.xlu0 0
      %352 = vperm.xlu0 %351, %v202
      %v353 = vpop.permute.xlu0 %352
      %356 = vset.pattern.permute.xlu0 0
      %357 = vperm.xlu0 %356, %v203
      %v358 = vpop.permute.xlu0 %357
      %361 = vset.pattern.permute.xlu0 0
      %362 = vperm.xlu0 %361, %v204
      %v363 = vpop.permute.xlu0 %362
      %366 = vset.pattern.permute.xlu0 0
      %367 = vperm.xlu0 %366, %v205
      %v368 = vpop.permute.xlu0 %367
      %v386 = vunpack.c.l.b16 %v206
      %v387 = vunpack.c.h.b16 %v206
      %v388 = vunpack.c.l.b16 %v207
      %v389 = vunpack.c.h.b16 %v207
      %v390 = vunpack.c.l.b16 %v208
      %v391 = vunpack.c.h.b16 %v208
      %v392 = vunpack.c.l.b16 %v209
      %v393 = vunpack.c.h.b16 %v209
      %v394 = vunpack.c.l.b16 %v210
      %v395 = vunpack.c.h.b16 %v210
      %v396 = vunpack.c.l.b16 %v211
      %v397 = vunpack.c.h.b16 %v211
      %v398 = vunpack.c.l.b16 %v212
      %v399 = vunpack.c.h.b16 %v212
      %v400 = vunpack.c.l.b16 %v213
      %v401 = vunpack.c.h.b16 %v213
      %v402 = vunpack.c.l.b16 %v214
      %v403 = vunpack.c.h.b16 %v214
      %v404 = vunpack.c.l.b16 %v215
      %v405 = vunpack.c.h.b16 %v215
      %v406 = vunpack.c.l.b16 %v216
      %v407 = vunpack.c.h.b16 %v216
      %v408 = vunpack.c.l.b16 %v217
      %v409 = vunpack.c.h.b16 %v217
      %v410 = vunpack.c.l.b16 %v218
      %v411 = vunpack.c.h.b16 %v218
      %v412 = vunpack.c.l.b16 %v219
      %v413 = vunpack.c.h.b16 %v219
      %v414 = vunpack.c.l.b16 %v220
      %v415 = vunpack.c.h.b16 %v220
      %v416 = vunpack.c.l.b16 %v221
      %v417 = vunpack.c.h.b16 %v221
      %v418 = vpack.c.b16 %v394, %v386
      %v419 = vpack.c.b16 %v395, %v387
      %v420 = vpack.c.b16 %v396, %v388
      %v421 = vpack.c.b16 %v397, %v389
      %v422 = vpack.c.b16 %v398, %v390
      %v423 = vpack.c.b16 %v399, %v391
      %v424 = vpack.c.b16 %v400, %v392
      %v425 = vpack.c.b16 %v401, %v393
      %v426 = vpack.c.b16 %v410, %v402
      %v427 = vpack.c.b16 %v411, %v403
      %v428 = vpack.c.b16 %v412, %v404
      %v429 = vpack.c.b16 %v413, %v405
      %v430 = vpack.c.b16 %v414, %v406
      %v431 = vpack.c.b16 %v415, %v407
      %v432 = vpack.c.b16 %v416, %v408
      %v433 = vpack.c.b16 %v417, %v409
      %v578 = vunpack.c.l.b16 %v222
      %v579 = vunpack.c.l.b16 %v223
      %v580 = vunpack.c.l.b16 %v224
      %v581 = vunpack.c.l.b16 %v225
      %v582 = vunpack.c.l.b16 %v226
      %v583 = vunpack.c.l.b16 %v227
      %v584 = vunpack.c.l.b16 %v228
      %v585 = vunpack.c.l.b16 %v229
      %v586 = vunpack.c.l.b16 %v230
      %v587 = vunpack.c.l.b16 %v231
      %v588 = vunpack.c.l.b16 %v232
      %v589 = vunpack.c.l.b16 %v233
      %v590 = vunpack.c.l.b16 %v234
      %v591 = vunpack.c.l.b16 %v235
      %v592 = vunpack.c.l.b16 %v236
      %v593 = vunpack.c.l.b16 %v237
      %v594 = vunpack.c.l.b16 %v238
      %v595 = vunpack.c.l.b16 %v239
      %v596 = vunpack.c.l.b16 %v240
      %v597 = vunpack.c.l.b16 %v241
      %v598 = vunpack.c.l.b16 %v242
      %v599 = vunpack.c.l.b16 %v243
      %v600 = vunpack.c.l.b16 %v244
      %v601 = vunpack.c.l.b16 %v245
      %v602 = vunpack.c.l.b16 %v246
      %v603 = vunpack.c.l.b16 %v247
      %v604 = vunpack.c.l.b16 %v248
      %v605 = vunpack.c.l.b16 %v249
      %v606 = vunpack.c.l.b16 %v250
      %v607 = vunpack.c.l.b16 %v251
      %v608 = vunpack.c.l.b16 %v252
      %v609 = vunpack.c.l.b16 %v253
      %v610 = vunpack.c.l.b16 %v254
      %v611 = vunpack.c.l.b16 %v255
      %v612 = vunpack.c.l.b16 %v256
      %v613 = vunpack.c.l.b16 %v257
      %v614 = vunpack.c.l.b16 %v258
      %v615 = vunpack.c.l.b16 %v259
      %v616 = vunpack.c.l.b16 %v260
      %v617 = vunpack.c.l.b16 %v261
      %v618 = vunpack.c.l.b16 %v262
      %v619 = vunpack.c.l.b16 %v263
      %v620 = vunpack.c.l.b16 %v264
      %v621 = vunpack.c.l.b16 %v265
      %v622 = vunpack.c.l.b16 %v266
      %v623 = vunpack.c.l.b16 %v267
      %v624 = vunpack.c.l.b16 %v268
      %v625 = vunpack.c.l.b16 %v269
      %v626 = vunpack.c.l.b16 %v270
      %v627 = vunpack.c.l.b16 %v271
      %v628 = vunpack.c.l.b16 %v272
      %v629 = vunpack.c.l.b16 %v273
      %v630 = vunpack.c.l.b16 %v274
      %v631 = vunpack.c.l.b16 %v275
      %v632 = vunpack.c.l.b16 %v276
      %v633 = vunpack.c.l.b16 %v277
      %v634 = vunpack.c.l.b16 %v278
      %v635 = vunpack.c.l.b16 %v279
      %v636 = vunpack.c.l.b16 %v280
      %v637 = vunpack.c.l.b16 %v281
      %v638 = vunpack.c.l.b16 %v282
      %v639 = vunpack.c.l.b16 %v283
      %v640 = vunpack.c.l.b16 %v284
      %v641 = vunpack.c.l.b16 %v285
      %v642 = vunpack.c.l.b16 %v286
      %v643 = vunpack.c.l.b16 %v287
      %v644 = vunpack.c.l.b16 %v288
      %v645 = vunpack.c.l.b16 %v289
      %v646 = vunpack.c.l.b16 %v290
      %v647 = vunpack.c.l.b16 %v291
      %v648 = vunpack.c.l.b16 %v292
      %v649 = vunpack.c.l.b16 %v293
      %v650 = vunpack.c.l.b16 %v294
      %v651 = vunpack.c.l.b16 %v295
      %v652 = vunpack.c.l.b16 %v296
      %v653 = vunpack.c.l.b16 %v297
      %v654 = vunpack.c.l.b16 %v298
      %v655 = vunpack.c.l.b16 %v299
      %v656 = vunpack.c.l.b16 %v300
      %v657 = vunpack.c.l.b16 %v301
      %v658 = vunpack.c.l.b16 %v302
      %v659 = vunpack.c.l.b16 %v303
      %v660 = vunpack.c.l.b16 %v304
      %v661 = vunpack.c.l.b16 %v305
      %v662 = vunpack.c.l.b16 %v306
      %v663 = vunpack.c.l.b16 %v307
      %v664 = vunpack.c.l.b16 %v308
      %v665 = vunpack.c.l.b16 %v309
      %v666 = vunpack.c.l.b16 %v310
      %v667 = vunpack.c.l.b16 %v311
      %v668 = vunpack.c.l.b16 %v312
      %v669 = vunpack.c.l.b16 %v313
      %v670 = vunpack.c.l.b16 %v314
      %v671 = vunpack.c.l.b16 %v315
      %v672 = vunpack.c.l.b16 %v316
      %v673 = vunpack.c.l.b16 %v317
      %v674 = vunpack.c.l.b16 %v318
      %v675 = vunpack.c.l.b16 %v319
      %v676 = vunpack.c.l.b16 %v320
      %v677 = vunpack.c.l.b16 %v321
      %v678 = vunpack.c.l.b16 %v322
      %v679 = vunpack.c.l.b16 %v323
      %v680 = vunpack.c.l.b16 %v324
      %v681 = vunpack.c.l.b16 %v325
      %v682 = vunpack.c.l.b16 %v326
      %v683 = vunpack.c.l.b16 %v327
      %v684 = vunpack.c.l.b16 %v328
      %v685 = vunpack.c.l.b16 %v329
      %v686 = vunpack.c.l.b16 %v330
      %v687 = vunpack.c.l.b16 %v331
      %v688 = vunpack.c.l.b16 %v332
      %v689 = vunpack.c.l.b16 %v333
      %v690 = vunpack.c.l.b16 %v334
      %v691 = vunpack.c.l.b16 %v335
      %v692 = vunpack.c.l.b16 %v336
      %v693 = vunpack.c.l.b16 %v337
      %v694 = vunpack.c.l.b16 %v338
      %v695 = vunpack.c.l.b16 %v339
      %v696 = vunpack.c.l.b16 %v340
      %v697 = vunpack.c.l.b16 %v341
      %v698 = vunpack.c.l.b16 %v342
      %v699 = vunpack.c.l.b16 %v343
      %v700 = vunpack.c.l.b16 %v344
      %v701 = vunpack.c.l.b16 %v345
      %v702 = vunpack.c.l.b16 %v346
      %v703 = vunpack.c.l.b16 %v347
      %v704 = vunpack.c.l.b16 %v348
      %v705 = vunpack.c.l.b16 %v349
      %v706 = vpack.c.b16 %v579, %v578
      %v707 = vpack.c.b16 %v581, %v580
      %v708 = vpack.c.b16 %v583, %v582
      %v709 = vpack.c.b16 %v585, %v584
      %v710 = vpack.c.b16 %v587, %v586
      %v711 = vpack.c.b16 %v589, %v588
      %v712 = vpack.c.b16 %v591, %v590
      %v713 = vpack.c.b16 %v593, %v592
      %v714 = vpack.c.b16 %v595, %v594
      %v715 = vpack.c.b16 %v597, %v596
      %v716 = vpack.c.b16 %v599, %v598
      %v717 = vpack.c.b16 %v601, %v600
      %v718 = vpack.c.b16 %v603, %v602
      %v719 = vpack.c.b16 %v605, %v604
      %v720 = vpack.c.b16 %v607, %v606
      %v721 = vpack.c.b16 %v609, %v608
      %v722 = vpack.c.b16 %v611, %v610
      %v723 = vpack.c.b16 %v613, %v612
      %v724 = vpack.c.b16 %v615, %v614
      %v725 = vpack.c.b16 %v617, %v616
      %v726 = vpack.c.b16 %v619, %v618
      %v727 = vpack.c.b16 %v621, %v620
      %v728 = vpack.c.b16 %v623, %v622
      %v729 = vpack.c.b16 %v625, %v624
      %v730 = vpack.c.b16 %v627, %v626
      %v731 = vpack.c.b16 %v629, %v628
      %v732 = vpack.c.b16 %v631, %v630
      %v733 = vpack.c.b16 %v633, %v632
      %v734 = vpack.c.b16 %v635, %v634
      %v735 = vpack.c.b16 %v637, %v636
      %v736 = vpack.c.b16 %v639, %v638
      %v737 = vpack.c.b16 %v641, %v640
      %v738 = vpack.c.b16 %v643, %v642
      %v739 = vpack.c.b16 %v645, %v644
      %v740 = vpack.c.b16 %v647, %v646
      %v741 = vpack.c.b16 %v649, %v648
      %v742 = vpack.c.b16 %v651, %v650
      %v743 = vpack.c.b16 %v653, %v652
      %v744 = vpack.c.b16 %v655, %v654
      %v745 = vpack.c.b16 %v657, %v656
      %v746 = vpack.c.b16 %v659, %v658
      %v747 = vpack.c.b16 %v661, %v660
      %v748 = vpack.c.b16 %v663, %v662
      %v749 = vpack.c.b16 %v665, %v664
      %v750 = vpack.c.b16 %v667, %v666
      %v751 = vpack.c.b16 %v669, %v668
      %v752 = vpack.c.b16 %v671, %v670
      %v753 = vpack.c.b16 %v673, %v672
      %v754 = vpack.c.b16 %v675, %v674
      %v755 = vpack.c.b16 %v677, %v676
      %v756 = vpack.c.b16 %v679, %v678
      %v757 = vpack.c.b16 %v681, %v680
      %v758 = vpack.c.b16 %v683, %v682
      %v759 = vpack.c.b16 %v685, %v684
      %v760 = vpack.c.b16 %v687, %v686
      %v761 = vpack.c.b16 %v689, %v688
      %v762 = vpack.c.b16 %v691, %v690
      %v763 = vpack.c.b16 %v693, %v692
      %v764 = vpack.c.b16 %v695, %v694
      %v765 = vpack.c.b16 %v697, %v696
      %v766 = vpack.c.b16 %v699, %v698
      %v767 = vpack.c.b16 %v701, %v700
      %v768 = vpack.c.b16 %v703, %v702
      %v769 = vpack.c.b16 %v705, %v704
      %834 = vmatpush.bf16.msra.mxu0 %v713
      %835 = vmatpush.bf16.msra.mxu0 %v712
      %836 = vmatpush.bf16.msra.mxu0 %v711
      %837 = vmatpush.bf16.msra.mxu0 %v710
      %838 = vmatpush.bf16.msra.mxu0 %v709
      %839 = vmatpush.bf16.msra.mxu0 %v708
      %840 = vmatpush.bf16.msra.mxu0 %v707
      %841 = vmatpush.bf16.msra.mxu0 %v706
      %842 = vmatmul.bf16.gmra.mxu0 %v418
      %v843 = vpop.f32.mrf.mxu0
      %v844 = vadd.f32 %v353, %v843
      %v845 = vpop.f32.mrf.mxu0
      %v846 = vadd.f32 %v358, %v845
      %847 = vmatmul.bf16.gmra.mxu0 %v426
      %v848 = vpop.f32.mrf.mxu0
      %v849 = vadd.f32 %v363, %v848
      %v850 = vpop.f32.mrf.mxu0
      %v851 = vadd.f32 %v368, %v850
      %852 = vdwg.mxu0
      %853 = vmatpush.bf16.msra.mxu0 %v721
      %854 = vmatpush.bf16.msra.mxu0 %v720
      %855 = vmatpush.bf16.msra.mxu0 %v719
      %856 = vmatpush.bf16.msra.mxu0 %v718
      %857 = vmatpush.bf16.msra.mxu0 %v717
      %858 = vmatpush.bf16.msra.mxu0 %v716
      %859 = vmatpush.bf16.msra.mxu0 %v715
      %860 = vmatpush.bf16.msra.mxu0 %v714
      %861 = vmatmul.bf16.gmra.mxu0 %v419
      %v862 = vpop.f32.mrf.mxu0
      %v863 = vadd.f32 %v844, %v862
      %v864 = vpop.f32.mrf.mxu0
      %v865 = vadd.f32 %v846, %v864
      %866 = vmatmul.bf16.gmra.mxu0 %v427
      %v867 = vpop.f32.mrf.mxu0
      %v868 = vadd.f32 %v849, %v867
      %v869 = vpop.f32.mrf.mxu0
      %v870 = vadd.f32 %v851, %v869
      %871 = vdwg.mxu0
      %872 = vmatpush.bf16.msra.mxu0 %v729
      %873 = vmatpush.bf16.msra.mxu0 %v728
      %874 = vmatpush.bf16.msra.mxu0 %v727
      %875 = vmatpush.bf16.msra.mxu0 %v726
      %876 = vmatpush.bf16.msra.mxu0 %v725
      %877 = vmatpush.bf16.msra.mxu0 %v724
      %878 = vmatpush.bf16.msra.mxu0 %v723
      %879 = vmatpush.bf16.msra.mxu0 %v722
      %880 = vmatmul.bf16.gmra.mxu0 %v420
      %v881 = vpop.f32.mrf.mxu0
      %v882 = vadd.f32 %v863, %v881
      %v883 = vpop.f32.mrf.mxu0
      %v884 = vadd.f32 %v865, %v883
      %885 = vmatmul.bf16.gmra.mxu0 %v428
      %v886 = vpop.f32.mrf.mxu0
      %v887 = vadd.f32 %v868, %v886
      %v888 = vpop.f32.mrf.mxu0
      %v889 = vadd.f32 %v870, %v888
      %890 = vdwg.mxu0
      %891 = vmatpush.bf16.msra.mxu0 %v737
      %892 = vmatpush.bf16.msra.mxu0 %v736
      %893 = vmatpush.bf16.msra.mxu0 %v735
      %894 = vmatpush.bf16.msra.mxu0 %v734
      %895 = vmatpush.bf16.msra.mxu0 %v733
      %896 = vmatpush.bf16.msra.mxu0 %v732
      %897 = vmatpush.bf16.msra.mxu0 %v731
      %898 = vmatpush.bf16.msra.mxu0 %v730
      %899 = vmatmul.bf16.gmra.mxu0 %v421
      %v900 = vpop.f32.mrf.mxu0
      %v901 = vadd.f32 %v882, %v900
      %v902 = vpop.f32.mrf.mxu0
      %v903 = vadd.f32 %v884, %v902
      %904 = vmatmul.bf16.gmra.mxu0 %v429
      %v905 = vpop.f32.mrf.mxu0
      %v906 = vadd.f32 %v887, %v905
      %v907 = vpop.f32.mrf.mxu0
      %v908 = vadd.f32 %v889, %v907
      %909 = vdwg.mxu0
      %910 = vmatpush.bf16.msra.mxu0 %v745
      %911 = vmatpush.bf16.msra.mxu0 %v744
      %912 = vmatpush.bf16.msra.mxu0 %v743
      %913 = vmatpush.bf16.msra.mxu0 %v742
      %914 = vmatpush.bf16.msra.mxu0 %v741
      %915 = vmatpush.bf16.msra.mxu0 %v740
      %916 = vmatpush.bf16.msra.mxu0 %v739
      %917 = vmatpush.bf16.msra.mxu0 %v738
      %918 = vmatmul.bf16.gmra.mxu0 %v422
      %v919 = vpop.f32.mrf.mxu0
      %v920 = vadd.f32 %v901, %v919
      %v921 = vpop.f32.mrf.mxu0
      %v922 = vadd.f32 %v903, %v921
      %923 = vmatmul.bf16.gmra.mxu0 %v430
      %v924 = vpop.f32.mrf.mxu0
      %v925 = vadd.f32 %v906, %v924
      %v926 = vpop.f32.mrf.mxu0
      %v927 = vadd.f32 %v908, %v926
      %928 = vdwg.mxu0
      %929 = vmatpush.bf16.msra.mxu0 %v753
      %930 = vmatpush.bf16.msra.mxu0 %v752
      %931 = vmatpush.bf16.msra.mxu0 %v751
      %932 = vmatpush.bf16.msra.mxu0 %v750
      %933 = vmatpush.bf16.msra.mxu0 %v749
      %934 = vmatpush.bf16.msra.mxu0 %v748
      %935 = vmatpush.bf16.msra.mxu0 %v747
      %936 = vmatpush.bf16.msra.mxu0 %v746
      %937 = vmatmul.bf16.gmra.mxu0 %v423
      %v938 = vpop.f32.mrf.mxu0
      %v939 = vadd.f32 %v920, %v938
      %v940 = vpop.f32.mrf.mxu0
      %v941 = vadd.f32 %v922, %v940
      %942 = vmatmul.bf16.gmra.mxu0 %v431
      %v943 = vpop.f32.mrf.mxu0
      %v944 = vadd.f32 %v925, %v943
      %v945 = vpop.f32.mrf.mxu0
      %v946 = vadd.f32 %v927, %v945
      %947 = vdwg.mxu0
      %948 = vmatpush.bf16.msra.mxu0 %v761
      %949 = vmatpush.bf16.msra.mxu0 %v760
      %950 = vmatpush.bf16.msra.mxu0 %v759
      %951 = vmatpush.bf16.msra.mxu0 %v758
      %952 = vmatpush.bf16.msra.mxu0 %v757
      %953 = vmatpush.bf16.msra.mxu0 %v756
      %954 = vmatpush.bf16.msra.mxu0 %v755
      %955 = vmatpush.bf16.msra.mxu0 %v754
      %956 = vmatmul.bf16.gmra.mxu0 %v424
      %v957 = vpop.f32.mrf.mxu0
      %v958 = vadd.f32 %v939, %v957
      %v959 = vpop.f32.mrf.mxu0
      %v960 = vadd.f32 %v941, %v959
      %961 = vmatmul.bf16.gmra.mxu0 %v432
      %v962 = vpop.f32.mrf.mxu0
      %v963 = vadd.f32 %v944, %v962
      %v964 = vpop.f32.mrf.mxu0
      %v965 = vadd.f32 %v946, %v964
      %966 = vdwg.mxu0
      %967 = vmatpush.bf16.msra.mxu0 %v769
      %968 = vmatpush.bf16.msra.mxu0 %v768
      %969 = vmatpush.bf16.msra.mxu0 %v767
      %970 = vmatpush.bf16.msra.mxu0 %v766
      %971 = vmatpush.bf16.msra.mxu0 %v765
      %972 = vmatpush.bf16.msra.mxu0 %v764
      %973 = vmatpush.bf16.msra.mxu0 %v763
      %974 = vmatpush.bf16.msra.mxu0 %v762
      %975 = vmatmul.bf16.gmra.mxu0 %v425
      %v976 = vpop.f32.mrf.mxu0
      %v977 = vadd.f32 %v958, %v976
      %v978 = vpop.f32.mrf.mxu0
      %v979 = vadd.f32 %v960, %v978
      %980 = vmatmul.bf16.gmra.mxu0 %v433
      %v981 = vpop.f32.mrf.mxu0
      %v982 = vadd.f32 %v963, %v981
      %v983 = vpop.f32.mrf.mxu0
      %v984 = vadd.f32 %v965, %v983
      %985 = vdwg.mxu0
      %vm986 = vcmask 15360
      %v987 = vsel %vm986, %v977, 0.0
      %v988 = vsel %vm986, %v979, 0.0
      %v989 = vadd.f32 %v987, %v988
      %v990 = vsel %vm986, %v982, 0.0
      %v991 = vadd.f32 %v989, %v990
      %v992 = vsel %vm986, %v984, 0.0
      %v993 = vadd.f32 %v991, %v992
      %v994 = vrot.slane %v993, 4
      %v995 = vadd.f32 %v993, %v994
      %v996 = vrot.slane %v995, 2
      %v997 = vadd.f32 %v995, %v996
      %v998 = vrot.slane %v997, 1
      %v999 = vadd.f32 %v997, %v998
      %v1000 = vrcp.pop 32.0
      %v1001 = vmul.f32 32.0, %v1000
      %v1002 = vsub.f32 1.0, %v1001
      %v1003 = vmul.f32 %v1000, %v1002
      %v1004 = vadd.f32 %v1000, %v1003
      %vm1005 = vweird.f32 %v1000
      %v1006 = vsel %vm1005, %v1000, %v1004
      %v1007 = vmul.f32 %v999, %v1006
      %v1008 = vsub.f32 %v977, %v1007
      %v1009 = vsub.f32 %v979, %v1007
      %v1010 = vsub.f32 %v982, %v1007
      %v1011 = vsub.f32 %v984, %v1007
      %v1012 = vmul.f32 %v1008, %v1008
      %v1013 = vmul.f32 %v1009, %v1009
      %v1014 = vmul.f32 %v1010, %v1010
      %v1015 = vmul.f32 %v1011, %v1011
      %v1016 = vsel %vm986, %v1012, 0.0
      %v1017 = vsel %vm986, %v1013, 0.0
      %v1018 = vadd.f32 %v1016, %v1017
      %v1019 = vsel %vm986, %v1014, 0.0
      %v1020 = vadd.f32 %v1018, %v1019
      %v1021 = vsel %vm986, %v1015, 0.0
      %v1022 = vadd.f32 %v1020, %v1021
      %v1023 = vrot.slane %v1022, 4
      %v1024 = vadd.f32 %v1022, %v1023
      %v1025 = vrot.slane %v1024, 2
      %v1026 = vadd.f32 %v1024, %v1025
      %v1027 = vrot.slane %v1026, 1
      %v1028 = vadd.f32 %v1026, %v1027
      %v1029 = vmul.f32 %v1028, %v1006
      %v1030 = vadd.f32 %v1029, 1e-05
      %v1031 = vrsqrt.pop %v1030
      %v1032 = vmul.f32 %v1031, %v1030
      %v1033 = vmul.f32 %v1032, %v1031
      %v1034 = vmul.f32 0.5, %v1033
      %v1035 = vsub.f32 1.5, %v1034
      %v1036 = vmul.f32 %v1031, %v1035
      %vm1037 = vweird.f32 %v1030
      %vm1038 = vweird.f32 %v1031
      %vm1039 = vmor %vm1037, %vm1038
      %v1040 = vsel %vm1039, %v1031, %v1036
      %v1041 = vmul.f32 %v1008, %v1040
      %v1042 = vmul.f32 %v1009, %v1040
      %v1043 = vmul.f32 %v1010, %v1040
      %v1044 = vmul.f32 %v1011, %v1040
      %1045 = vset.pattern.permute.xlu0 1
      %1046 = vperm.xlu0 %1045, %v202
      %v1047 = vpop.permute.xlu0 %1046
      %1049 = vset.pattern.permute.xlu0 1
      %1050 = vperm.xlu0 %1049, %v203
      %v1051 = vpop.permute.xlu0 %1050
      %1053 = vset.pattern.permute.xlu0 1
      %1054 = vperm.xlu0 %1053, %v204
      %v1055 = vpop.permute.xlu0 %1054
      %1057 = vset.pattern.permute.xlu0 1
      %1058 = vperm.xlu0 %1057, %v205
      %v1059 = vpop.permute.xlu0 %1058
      %v1061 = vmul.f32 %v1041, %v1047
      %v1062 = vmul.f32 %v1042, %v1051
      %v1063 = vmul.f32 %v1043, %v1055
      %v1064 = vmul.f32 %v1044, %v1059
      %1065 = vset.pattern.permute.xlu0 2
      %1066 = vperm.xlu0 %1065, %v202
      %v1067 = vpop.permute.xlu0 %1066
      %1069 = vset.pattern.permute.xlu0 2
      %1070 = vperm.xlu0 %1069, %v203
      %v1071 = vpop.permute.xlu0 %1070
      %1073 = vset.pattern.permute.xlu0 2
      %1074 = vperm.xlu0 %1073, %v204
      %v1075 = vpop.permute.xlu0 %1074
      %1077 = vset.pattern.permute.xlu0 2
      %1078 = vperm.xlu0 %1077, %v205
      %v1079 = vpop.permute.xlu0 %1078
      %v1081 = vadd.f32 %v1061, %v1067
      %v1082 = vadd.f32 %v1062, %v1071
      %v1083 = vadd.f32 %v1063, %v1075
      %v1084 = vadd.f32 %v1064, %v1079
      %v1085 = vpack.c.bf16 %v1081, %v1081
      %v1086 = vpack.c.bf16 %v1082, %v1082
      %v1087 = vpack.c.bf16 %v1083, %v1083
      %v1088 = vpack.c.bf16 %v1084, %v1084
      %vm1089 = vcmask 11264
      %1090 = vst.msk [vmem:[%s201] sm:$0xf] %vm1089, %v1085
      %1091 = vst.msk [vmem:[%s201 + $0x4] sm:$0xf] %vm1089, %v1086
      %1092 = vst.msk [vmem:[%s201 + $0x8] sm:$0xf] %vm1089, %v1087
      %1093 = vst.msk [vmem:[%s201 + $0xc] sm:$0xf] %vm1089, %v1088
      %p1094 = scmp.lt.s32.totalorder %s18, 1
      %s1095 = scalar_select %p1094, %s18, 1
      %p1096 = scmp.lt.s32.totalorder %s19, 0
      %s1097 = scalar_select %p1096, %s19, 0
      %s1098 = smul.addr %s1095, 4
      %s1099 = sadd.s32 %s1097, %s1098
      %s1100 = smul.addr %s1099, 4
      %s1101 = scalar_lea.vmem %s3, %s1100
      // Predicated region
      $region33: #{cross_scale_patch_embedding.5} parent=31 // pred_check
        %p1102 = pneg %p116
      $region34: #{cross_scale_patch_embedding.5} parent=31 // pred_check_branch
        %1104 = sbr.rel (%p1102) target = $region36
      $region35: #{cross_scale_patch_embedding.5} parent=31 // pred_region
        _
      $region36: #{cross_scale_patch_embedding.5} parent=31 // pred_fallthru
        _
    $region32: #{cross_scale_patch_embedding.5} parent=5 // pred_fallthru
      _
    %p1105 = scmp.le.s32.totalorder 2, %s9
    // Predicated region
    $region37: #{cross_scale_patch_embedding.5} parent=5 // pred_check
      %p1106 = pneg %p1105
    $region38: #{cross_scale_patch_embedding.5} parent=5 // pred_check_branch
      %1108 = sbr.rel (%p1106) target = $region40
    $region39: #{cross_scale_patch_embedding.5} parent=5 // pred_region
      %s1109 = ssub.s32 %s9, 2
      // Predicated region
      $region41: #{cross_scale_patch_embedding.5} parent=39 // pred_check
        %p1110 = pneg %p122
      $region42: #{cross_scale_patch_embedding.5} parent=39 // pred_check_branch
        %1112 = sbr.rel (%p1110) target = $region44
      $region43: #{cross_scale_patch_embedding.5} parent=39 // pred_region
        %p1113 = scmp.lt.s32.totalorder %s20, 1
        %s1114 = scalar_select %p1113, %s20, 1
        %p1115 = scmp.lt.s32.totalorder %s21, 0
        %s1116 = scalar_select %p1115, %s21, 0
        %s1117 = smul.addr %s1114, 4
        %s1118 = sadd.s32 %s1116, %s1117
        %s1119 = smul.addr %s1118, 4
        %s1120 = scalar_lea.vmem %s3, %s1119
      $region44: #{cross_scale_patch_embedding.5} parent=39 // pred_fallthru
        _
    $region40: #{cross_scale_patch_embedding.5} parent=5 // pred_fallthru
      _
  $region6: #{cross_scale_patch_embedding.5} parent=0 // loop_footer
    %s13 = sadd.s32 1, %s9
  $region7: #{cross_scale_patch_embedding.5} parent=0 // loop_footer_branch
    %8 = sbr.rel target = $region3
  $region8: #{cross_scale_patch_embedding.5} parent=0 // loop_exit
    _

</llo_original>
